<compile_context>
chip_gen: v6e
topology: v6e:2x2x1
jax: 0.10.0
libtpu: 0.0.40
codegen_flags: <defaults>
</compile_context>

<pallas_src>
import math
import numpy as np
import jax
import jax.numpy as jnp
from jax.experimental import pallas as pl
from jax.experimental.pallas import tpu as pltpu


def _vmem_spec():
    # Tiny, static shapes -> whole arrays live in VMEM, single kernel invocation (no grid).
    return pl.BlockSpec(memory_space=pltpu.MemorySpace.VMEM)


def _softplus(v):
    # Overflow-safe softplus; exp/log1p ride the EUP slot.
    return jnp.maximum(v, 0.0) + jnp.log1p(jnp.exp(-jnp.abs(v)))


# --------------------------------------------------------------------------------------
# Fused kernel: z0 sample -> IAF flow (unrolled) -> z_k -> Bayesian linear sample
# --------------------------------------------------------------------------------------
def fused_forward_kernel(q0_mean_ref, q0_logvar_ref, eps_z_ref,
                         w1_ref, b1_ref, w2_ref, b2_ref,
                         w3s_ref, b3s_ref, w3g_ref, b3g_ref,
                         x_ref, wmu_t_ref, lam_t_ref, wrho_t_ref,
                         bias_mu_ref, bias_rho_ref, eps_act_ref,
                         out_ref):
    f32 = jnp.float32

    # --- sample_z: z0 = q0_mean + sqrt(exp(q0_log_var)) * eps_z ---
    q0_std = jnp.exp(0.5 * q0_logvar_ref[...])
    z = q0_mean_ref[...] + q0_std * eps_z_ref[...]                     # (B, D)

    # --- PropagateFlow(IAF) — statically unrolled over stacked (padded) MADE weights ---
    num_transforms = w1_ref.shape[0]
    for t in range(num_transforms):
        h = jnp.dot(z, w1_ref[t], preferred_element_type=f32) + b1_ref[t]
        h = jnp.where(h >= 0, h, 0.1 * h)                              # LeakyReLU(0.1)
        h = jnp.dot(h, w2_ref[t], preferred_element_type=f32) + b2_ref[t]
        h = jnp.where(h >= 0, h, 0.1 * h)
        shift = jnp.dot(h, w3s_ref[t], preferred_element_type=f32) + b3s_ref[t]
        scale = jnp.dot(h, w3g_ref[t], preferred_element_type=f32) + b3g_ref[t]
        gate = jax.nn.sigmoid(scale)
        z = z * gate + (1.0 - gate) * shift
    # log_det_q (= sum log_sigmoid(scale)) is never consumed by forward(); not materialized.

    # --- z_k = zs[-1]: last batch row of the flow output, shape (1, D) ---
    b = z.shape[0]
    z_k = z[b - 1:b, :]                                                # lane-aligned sublane slice

    # --- Bayesian linear sample, all params in (In, Out) layout, no in-kernel transposes.
    #     z_k broadcasts along the contraction axis, so it is folded into the LHS:
    #       x @ (wmu*alpha*z_k).T            == (x*z_k)    @ (wmu_t*alpha_t)
    #       x^2 @ [alpha*(1-alpha)*(wmu*z_k)^2].T == (x*z_k)^2 @ [alpha_t*(1-alpha_t)*wmu_t^2]
    x = x_ref[...]                                                     # (B, In)
    alpha = jax.nn.sigmoid(lam_t_ref[...])                             # (In, Out)
    wsig = _softplus(wrho_t_ref[...])                                  # (In, Out)
    wmu = wmu_t_ref[...]                                               # (In, Out)

    xz = x * z_k                                                       # (B, In), lane broadcast
    e_b = jnp.dot(xz, wmu * alpha, preferred_element_type=f32) + bias_mu_ref[...]
    bsig = _softplus(bias_rho_ref[...])
    var_b = (jnp.dot(x * x, alpha * (wsig * wsig), preferred_element_type=f32)
             + jnp.dot(xz * xz, alpha * (1.0 - alpha) * (wmu * wmu),
                       preferred_element_type=f32)
             + bsig * bsig)
    out_ref[...] = e_b + jnp.sqrt(var_b) * eps_act_ref[...]            # reparameterized sample
    # TODO(synk): the self.kl side-effect branch (training / calculate_log_probs=True,
    # r_flow, r0_*, KL reductions) is not implemented; it does not affect forward()'s value.


@jax.jit
def fused_forward(q0_mean, q0_log_var, eps_z,
                  w1_stack, b1_stack, w2_stack, b2_stack,
                  w3s_stack, b3s_stack, w3g_stack, b3g_stack,
                  x, wmu_t, lam_t, wrho_t, bias_mu, bias_rho, eps_act):
    B = x.shape[0]
    Out = wmu_t.shape[1]
    vmem = _vmem_spec()
    return pl.pallas_call(
        fused_forward_kernel,
        out_shape=jax.ShapeDtypeStruct((B, Out), jnp.float32),
        in_specs=[vmem] * 18,
        out_specs=vmem,
    )(q0_mean, q0_log_var, eps_z,
      w1_stack, b1_stack, w2_stack, b2_stack,
      w3s_stack, b3s_stack, w3g_stack, b3g_stack,
      x, wmu_t, lam_t, wrho_t, bias_mu, bias_rho, eps_act)


# --------------------------------------------------------------------------------------
# Glue: MADE mask construction (exact replica of MADE.update_masks, num_masks=1, seed=0)
# --------------------------------------------------------------------------------------
def made_masks(nin, hidden_sizes, nout, seed=0, natural_ordering=False):
    L = len(hidden_sizes)
    rng = np.random.RandomState(seed)
    m = {}
    m[-1] = np.arange(nin) if natural_ordering else rng.permutation(nin)
    for l in range(L):
        m[l] = rng.randint(m[l - 1].min(), nin - 1, size=hidden_sizes[l])
    masks = [m[l - 1][:, None] <= m[l][None, :] for l in range(L)]
    masks.append(m[L - 1][:, None] < m[-1][None, :])
    if nout > nin:
        k = int(nout / nin)
        masks[-1] = np.concatenate([masks[-1]] * k, axis=1)
    return masks  # masks[i] has shape (fan_in_i, fan_out_i)


if __name__ == "__main__":
    in_features, out_features = 32, 16
    batch = 8
    num_transforms = 2
    hidden = [75, 75]
    H_PAD = 128  # zero-pad MADE hidden dim 75 -> 128 for dense, unmasked MXU tiles

    keys = iter(jax.random.split(jax.random.PRNGKey(0), 64))
    nxt = lambda: next(keys)

    # --- BayesianLinearFlow parameters (deterministic synthetic init, shapes per __init__) ---
    weight_mu = jax.random.uniform(nxt(), (out_features, in_features), jnp.float32, -0.01, 0.01)
    weight_rho = jax.random.uniform(nxt(), (out_features, in_features), jnp.float32, -5.0, -4.0)
    lambdal = jax.random.uniform(nxt(), (out_features, in_features), jnp.float32, 1.5, 2.5)
    bias_mu = jax.random.uniform(nxt(), (1, out_features), jnp.float32, -0.01, 0.01)
    bias_rho = jax.random.uniform(nxt(), (1, out_features), jnp.float32, -5.0, -4.0)
    q0_mean = 0.1 * jax.random.normal(nxt(), (1, in_features), jnp.float32)
    q0_log_var = -9.0 + 0.1 * jax.random.normal(nxt(), (1, in_features), jnp.float32)

    # --- z_flow: num_transforms IAF transforms, each a MADE(in -> 75 -> 75 -> 2*in) ---
    masks = made_masks(in_features, hidden, 2 * in_features, seed=0)
    dims = [in_features] + hidden + [2 * in_features]

    def linear_init(key, fan_in, fan_out):
        k1, k2 = jax.random.split(key)
        bound = 1.0 / math.sqrt(fan_in)
        W = jax.random.uniform(k1, (fan_out, fan_in), jnp.float32, -bound, bound)
        b = jax.random.uniform(k2, (1, fan_out), jnp.float32, -bound, bound)
        return W, b

    flow_params = []  # per transform: [(w1t, b1), (w2t, b2), (w3t, b3)], masked, (in,out) layout
    for _ in range(num_transforms):
        layers = []
        for li, (d0, d1) in enumerate(zip(dims, dims[1:])):
            W, b = linear_init(nxt(), d0, d1)
            m = jnp.asarray(masks[li].astype(np.float32).T)   # stored mask shape (d1, d0)
            Wt = (m * W).T                                    # pre-masked, transposed -> (d0, d1)
            layers.append((Wt, b))
        flow_params.append(layers)

    # --- Build padded + stacked flow weights for the fused kernel ---
    H0, H1 = hidden
    w1s, b1s, w2s, b2s, w3ss, b3ss, w3gs, b3gs = ([] for _ in range(8))
    for (w1t, b1), (w2t, b2), (w3t, b3) in flow_params:
        w1s.append(jnp.zeros((in_features, H_PAD), jnp.float32).at[:, :H0].set(w1t))
        b1s.append(jnp.zeros((1, H_PAD), jnp.float32).at[:, :H0].set(b1))
        w2s.append(jnp.zeros((H_PAD, H_PAD), jnp.float32).at[:H0, :H1].set(w2t))
        b2s.append(jnp.zeros((1, H_PAD), jnp.float32).at[:, :H1].set(b2))
        w3ss.append(jnp.zeros((H_PAD, in_features), jnp.float32).at[:H1, :].set(w3t[:, :in_features]))
        w3gs.append(jnp.zeros((H_PAD, in_features), jnp.float32).at[:H1, :].set(w3t[:, in_features:]))
        b3ss.append(b3[:, :in_features])
        b3gs.append(b3[:, in_features:])
    w1_stack, b1_stack = jnp.stack(w1s), jnp.stack(b1s)
    w2_stack, b2_stack = jnp.stack(w2s), jnp.stack(b2s)
    w3s_stack, b3s_stack = jnp.stack(w3ss), jnp.stack(b3ss)
    w3g_stack, b3g_stack = jnp.stack(w3gs), jnp.stack(b3gs)

    # --- Pre-transpose Bayesian-linear params to (In, Out) ---
    wmu_t = weight_mu.T
    lam_t = lambdal.T
    wrho_t = weight_rho.T

    # --- Random draws (match reference reparameterization) ---
    eps_z = jax.random.normal(nxt(), (batch, in_features), jnp.float32)
    x = jax.random.normal(nxt(), (batch, in_features), jnp.float32)
    eps_act = jax.random.normal(nxt(), (batch, out_features), jnp.float32)

    # --- Run the fused Pallas kernel ---
    activations = fused_forward(
        q0_mean, q0_log_var, eps_z,
        w1_stack, b1_stack, w2_stack, b2_stack,
        w3s_stack, b3s_stack, w3g_stack, b3g_stack,
        x, wmu_t, lam_t, wrho_t, bias_mu, bias_rho, eps_act)
    jax.block_until_ready(activations)

    # --- Numpy float64 reference of the same forward pass (unpadded, original layout) ---
    def np64(a):
        return np.asarray(a, dtype=np.float64)

    def ref_forward():
        z = np64(q0_mean) + np.sqrt(np.exp(np64(q0_log_var))) * np64(eps_z)
        for (w1t, b1), (w2t, b2), (w3t, b3) in flow_params:
            h = z @ np64(w1t) + np64(b1)
            h = np.where(h >= 0, h, 0.1 * h)
            h = h @ np64(w2t) + np64(b2)
            h = np.where(h >= 0, h, 0.1 * h)
            out = h @ np64(w3t) + np64(b3)
            shift, scale = out[:, :in_features], out[:, in_features:]
            gate = 1.0 / (1.0 + np.exp(-scale))
            z = z * gate + (1.0 - gate) * shift
        z_k = z[-1:]
        alpha = 1.0 / (1.0 + np.exp(-np64(lambdal)))
        wsig = np.log1p(np.exp(np64(weight_rho)))
        e_w = np64(weight_mu) * alpha * z_k
        var_w = alpha * (wsig ** 2 + (1.0 - alpha) * (np64(weight_mu) * z_k) ** 2)
        e_b = np64(x) @ e_w.T + np64(bias_mu)
        bsig = np.log1p(np.exp(np64(bias_rho)))
        var_b = (np64(x) ** 2) @ var_w.T + bsig ** 2
        return e_b + np.sqrt(var_b) * np64(eps_act)

    ref = ref_forward()
    assert activations.shape == (batch, out_features)
    np.testing.assert_allclose(np.asarray(activations, dtype=np.float64), ref,
                               rtol=2e-2, atol=1e-3)
    print("KERNEL_OK")
</pallas_src>

<mosaic_0001>
module attributes {stable_mosaic.version = 11 : i64} {
  func.func @fused_forward_kernel(%arg0: memref<1x32xf32, #tpu.memory_space<vmem>>, %arg1: memref<1x32xf32, #tpu.memory_space<vmem>>, %arg2: memref<8x32xf32, #tpu.memory_space<vmem>>, %arg3: memref<2x32x128xf32, #tpu.memory_space<vmem>>, %arg4: memref<2x1x128xf32, #tpu.memory_space<vmem>>, %arg5: memref<2x128x128xf32, #tpu.memory_space<vmem>>, %arg6: memref<2x1x128xf32, #tpu.memory_space<vmem>>, %arg7: memref<2x128x32xf32, #tpu.memory_space<vmem>>, %arg8: memref<2x1x32xf32, #tpu.memory_space<vmem>>, %arg9: memref<2x128x32xf32, #tpu.memory_space<vmem>>, %arg10: memref<2x1x32xf32, #tpu.memory_space<vmem>>, %arg11: memref<8x32xf32, #tpu.memory_space<vmem>>, %arg12: memref<32x16xf32, #tpu.memory_space<vmem>>, %arg13: memref<32x16xf32, #tpu.memory_space<vmem>>, %arg14: memref<32x16xf32, #tpu.memory_space<vmem>>, %arg15: memref<1x16xf32, #tpu.memory_space<vmem>>, %arg16: memref<1x16xf32, #tpu.memory_space<vmem>>, %arg17: memref<8x16xf32, #tpu.memory_space<vmem>>, %arg18: memref<8x16xf32, #tpu.memory_space<vmem>>) attributes {dimension_semantics = [], scalar_prefetch = 0 : i64, scratch_operands = 0 : i64, tpu.core_type = #tpu.core_type<tc>} {
    %c0 = arith.constant 0 : index
    %c0_0 = arith.constant 0 : index
    %0 = vector.load %arg1[%c0, %c0_0] : memref<1x32xf32, #tpu.memory_space<vmem>>, vector<1x32xf32>
    %cst = arith.constant 5.000000e-01 : f32
    %1 = vector.broadcast %cst : f32 to vector<1x32xf32>
    %2 = arith.mulf %1, %0 : vector<1x32xf32>
    %3 = math.exp %2 : vector<1x32xf32>
    %c0_1 = arith.constant 0 : index
    %c0_2 = arith.constant 0 : index
    %4 = vector.load %arg0[%c0_1, %c0_2] : memref<1x32xf32, #tpu.memory_space<vmem>>, vector<1x32xf32>
    %c0_3 = arith.constant 0 : index
    %c0_4 = arith.constant 0 : index
    %5 = vector.load %arg2[%c0_3, %c0_4] : memref<8x32xf32, #tpu.memory_space<vmem>>, vector<8x32xf32>
    %6 = vector.broadcast %3 : vector<1x32xf32> to vector<8x32xf32>
    %7 = arith.mulf %6, %5 : vector<8x32xf32>
    %8 = vector.broadcast %4 : vector<1x32xf32> to vector<8x32xf32>
    %9 = arith.addf %8, %7 : vector<8x32xf32>
    %c0_5 = arith.constant 0 : index
    %c0_6 = arith.constant 0 : index
    %c0_7 = arith.constant 0 : index
    %10 = vector.load %arg3[%c0_5, %c0_6, %c0_7] : memref<2x32x128xf32, #tpu.memory_space<vmem>>, vector<1x32x128xf32>
    %11 = vector.shape_cast %10 : vector<1x32x128xf32> to vector<32x128xf32>
    %cst_8 = arith.constant dense<0.000000e+00> : vector<8x128xf32>
    %12 = tpu.matmul %9, %11, %cst_8 {dimension_numbers = #tpu.dot_dimension_numbers<[1], [0], [0], [1], [0, 0, 1, 1], [], []>} : vector<8x32xf32>, vector<32x128xf32>, vector<8x128xf32> -> vector<8x128xf32>
    %c0_9 = arith.constant 0 : index
    %c0_10 = arith.constant 0 : index
    %c0_11 = arith.constant 0 : index
    %13 = vector.load %arg4[%c0_9, %c0_10, %c0_11] : memref<2x1x128xf32, #tpu.memory_space<vmem>>, vector<1x1x128xf32>
    %14 = vector.shape_cast %13 : vector<1x1x128xf32> to vector<1x128xf32>
    %15 = vector.broadcast %14 : vector<1x128xf32> to vector<8x128xf32>
    %16 = arith.addf %12, %15 : vector<8x128xf32>
    %cst_12 = arith.constant 0.000000e+00 : f32
    %17 = vector.broadcast %cst_12 : f32 to vector<8x128xf32>
    %18 = arith.cmpf oge, %16, %17 : vector<8x128xf32>
    %cst_13 = arith.constant 1.000000e-01 : f32
    %19 = vector.broadcast %cst_13 : f32 to vector<8x128xf32>
    %20 = arith.mulf %19, %16 : vector<8x128xf32>
    %21 = arith.select %18, %16, %20 : vector<8x128xi1>, vector<8x128xf32>
    %c0_14 = arith.constant 0 : index
    %c0_15 = arith.constant 0 : index
    %c0_16 = arith.constant 0 : index
    %22 = vector.load %arg5[%c0_14, %c0_15, %c0_16] : memref<2x128x128xf32, #tpu.memory_space<vmem>>, vector<1x128x128xf32>
    %23 = vector.shape_cast %22 : vector<1x128x128xf32> to vector<128x128xf32>
    %cst_17 = arith.constant dense<0.000000e+00> : vector<8x128xf32>
    %24 = tpu.matmul %21, %23, %cst_17 {dimension_numbers = #tpu.dot_dimension_numbers<[1], [0], [0], [1], [0, 0, 1, 1], [], []>} : vector<8x128xf32>, vector<128x128xf32>, vector<8x128xf32> -> vector<8x128xf32>
    %c0_18 = arith.constant 0 : index
    %c0_19 = arith.constant 0 : index
    %c0_20 = arith.constant 0 : index
    %25 = vector.load %arg6[%c0_18, %c0_19, %c0_20] : memref<2x1x128xf32, #tpu.memory_space<vmem>>, vector<1x1x128xf32>
    %26 = vector.shape_cast %25 : vector<1x1x128xf32> to vector<1x128xf32>
    %27 = vector.broadcast %26 : vector<1x128xf32> to vector<8x128xf32>
    %28 = arith.addf %24, %27 : vector<8x128xf32>
    %cst_21 = arith.constant 0.000000e+00 : f32
    %29 = vector.broadcast %cst_21 : f32 to vector<8x128xf32>
    %30 = arith.cmpf oge, %28, %29 : vector<8x128xf32>
    %cst_22 = arith.constant 1.000000e-01 : f32
    %31 = vector.broadcast %cst_22 : f32 to vector<8x128xf32>
    %32 = arith.mulf %31, %28 : vector<8x128xf32>
    %33 = arith.select %30, %28, %32 : vector<8x128xi1>, vector<8x128xf32>
    %c0_23 = arith.constant 0 : index
    %c0_24 = arith.constant 0 : index
    %c0_25 = arith.constant 0 : index
    %34 = vector.load %arg7[%c0_23, %c0_24, %c0_25] : memref<2x128x32xf32, #tpu.memory_space<vmem>>, vector<1x128x32xf32>
    %35 = vector.shape_cast %34 : vector<1x128x32xf32> to vector<128x32xf32>
    %cst_26 = arith.constant dense<0.000000e+00> : vector<8x32xf32>
    %36 = tpu.matmul %33, %35, %cst_26 {dimension_numbers = #tpu.dot_dimension_numbers<[1], [0], [0], [1], [0, 0, 1, 1], [], []>} : vector<8x128xf32>, vector<128x32xf32>, vector<8x32xf32> -> vector<8x32xf32>
    %c0_27 = arith.constant 0 : index
    %c0_28 = arith.constant 0 : index
    %c0_29 = arith.constant 0 : index
    %37 = vector.load %arg8[%c0_27, %c0_28, %c0_29] : memref<2x1x32xf32, #tpu.memory_space<vmem>>, vector<1x1x32xf32>
    %38 = vector.shape_cast %37 : vector<1x1x32xf32> to vector<1x32xf32>
    %39 = vector.broadcast %38 : vector<1x32xf32> to vector<8x32xf32>
    %40 = arith.addf %36, %39 : vector<8x32xf32>
    %c0_30 = arith.constant 0 : index
    %c0_31 = arith.constant 0 : index
    %c0_32 = arith.constant 0 : index
    %41 = vector.load %arg9[%c0_30, %c0_31, %c0_32] : memref<2x128x32xf32, #tpu.memory_space<vmem>>, vector<1x128x32xf32>
    %42 = vector.shape_cast %41 : vector<1x128x32xf32> to vector<128x32xf32>
    %cst_33 = arith.constant dense<0.000000e+00> : vector<8x32xf32>
    %43 = tpu.matmul %33, %42, %cst_33 {dimension_numbers = #tpu.dot_dimension_numbers<[1], [0], [0], [1], [0, 0, 1, 1], [], []>} : vector<8x128xf32>, vector<128x32xf32>, vector<8x32xf32> -> vector<8x32xf32>
    %c0_34 = arith.constant 0 : index
    %c0_35 = arith.constant 0 : index
    %c0_36 = arith.constant 0 : index
    %44 = vector.load %arg10[%c0_34, %c0_35, %c0_36] : memref<2x1x32xf32, #tpu.memory_space<vmem>>, vector<1x1x32xf32>
    %45 = vector.shape_cast %44 : vector<1x1x32xf32> to vector<1x32xf32>
    %46 = vector.broadcast %45 : vector<1x32xf32> to vector<8x32xf32>
    %47 = arith.addf %43, %46 : vector<8x32xf32>
    %48 = arith.negf %47 : vector<8x32xf32>
    %49 = math.exp %48 : vector<8x32xf32>
    %cst_37 = arith.constant 1.000000e+00 : f32
    %50 = vector.broadcast %cst_37 : f32 to vector<8x32xf32>
    %51 = arith.addf %50, %49 : vector<8x32xf32>
    %52 = arith.divf %50, %51 : vector<8x32xf32>
    %53 = arith.mulf %9, %52 : vector<8x32xf32>
    %cst_38 = arith.constant 1.000000e+00 : f32
    %54 = vector.broadcast %cst_38 : f32 to vector<8x32xf32>
    %55 = arith.subf %54, %52 : vector<8x32xf32>
    %56 = arith.mulf %55, %40 : vector<8x32xf32>
    %57 = arith.addf %53, %56 : vector<8x32xf32>
    %c1 = arith.constant 1 : index
    %c0_39 = arith.constant 0 : index
    %c0_40 = arith.constant 0 : index
    %58 = vector.load %arg3[%c1, %c0_39, %c0_40] : memref<2x32x128xf32, #tpu.memory_space<vmem>>, vector<1x32x128xf32>
    %59 = vector.shape_cast %58 : vector<1x32x128xf32> to vector<32x128xf32>
    %cst_41 = arith.constant dense<0.000000e+00> : vector<8x128xf32>
    %60 = tpu.matmul %57, %59, %cst_41 {dimension_numbers = #tpu.dot_dimension_numbers<[1], [0], [0], [1], [0, 0, 1, 1], [], []>} : vector<8x32xf32>, vector<32x128xf32>, vector<8x128xf32> -> vector<8x128xf32>
    %c1_42 = arith.constant 1 : index
    %c0_43 = arith.constant 0 : index
    %c0_44 = arith.constant 0 : index
    %61 = vector.load %arg4[%c1_42, %c0_43, %c0_44] : memref<2x1x128xf32, #tpu.memory_space<vmem>>, vector<1x1x128xf32>
    %62 = vector.shape_cast %61 : vector<1x1x128xf32> to vector<1x128xf32>
    %63 = vector.broadcast %62 : vector<1x128xf32> to vector<8x128xf32>
    %64 = arith.addf %60, %63 : vector<8x128xf32>
    %cst_45 = arith.constant 0.000000e+00 : f32
    %65 = vector.broadcast %cst_45 : f32 to vector<8x128xf32>
    %66 = arith.cmpf oge, %64, %65 : vector<8x128xf32>
    %cst_46 = arith.constant 1.000000e-01 : f32
    %67 = vector.broadcast %cst_46 : f32 to vector<8x128xf32>
    %68 = arith.mulf %67, %64 : vector<8x128xf32>
    %69 = arith.select %66, %64, %68 : vector<8x128xi1>, vector<8x128xf32>
    %c1_47 = arith.constant 1 : index
    %c0_48 = arith.constant 0 : index
    %c0_49 = arith.constant 0 : index
    %70 = vector.load %arg5[%c1_47, %c0_48, %c0_49] : memref<2x128x128xf32, #tpu.memory_space<vmem>>, vector<1x128x128xf32>
    %71 = vector.shape_cast %70 : vector<1x128x128xf32> to vector<128x128xf32>
    %cst_50 = arith.constant dense<0.000000e+00> : vector<8x128xf32>
    %72 = tpu.matmul %69, %71, %cst_50 {dimension_numbers = #tpu.dot_dimension_numbers<[1], [0], [0], [1], [0, 0, 1, 1], [], []>} : vector<8x128xf32>, vector<128x128xf32>, vector<8x128xf32> -> vector<8x128xf32>
    %c1_51 = arith.constant 1 : index
    %c0_52 = arith.constant 0 : index
    %c0_53 = arith.constant 0 : index
    %73 = vector.load %arg6[%c1_51, %c0_52, %c0_53] : memref<2x1x128xf32, #tpu.memory_space<vmem>>, vector<1x1x128xf32>
    %74 = vector.shape_cast %73 : vector<1x1x128xf32> to vector<1x128xf32>
    %75 = vector.broadcast %74 : vector<1x128xf32> to vector<8x128xf32>
    %76 = arith.addf %72, %75 : vector<8x128xf32>
    %cst_54 = arith.constant 0.000000e+00 : f32
    %77 = vector.broadcast %cst_54 : f32 to vector<8x128xf32>
    %78 = arith.cmpf oge, %76, %77 : vector<8x128xf32>
    %cst_55 = arith.constant 1.000000e-01 : f32
    %79 = vector.broadcast %cst_55 : f32 to vector<8x128xf32>
    %80 = arith.mulf %79, %76 : vector<8x128xf32>
    %81 = arith.select %78, %76, %80 : vector<8x128xi1>, vector<8x128xf32>
    %c1_56 = arith.constant 1 : index
    %c0_57 = arith.constant 0 : index
    %c0_58 = arith.constant 0 : index
    %82 = vector.load %arg7[%c1_56, %c0_57, %c0_58] : memref<2x128x32xf32, #tpu.memory_space<vmem>>, vector<1x128x32xf32>
    %83 = vector.shape_cast %82 : vector<1x128x32xf32> to vector<128x32xf32>
    %cst_59 = arith.constant dense<0.000000e+00> : vector<8x32xf32>
    %84 = tpu.matmul %81, %83, %cst_59 {dimension_numbers = #tpu.dot_dimension_numbers<[1], [0], [0], [1], [0, 0, 1, 1], [], []>} : vector<8x128xf32>, vector<128x32xf32>, vector<8x32xf32> -> vector<8x32xf32>
    %c1_60 = arith.constant 1 : index
    %c0_61 = arith.constant 0 : index
    %c0_62 = arith.constant 0 : index
    %85 = vector.load %arg8[%c1_60, %c0_61, %c0_62] : memref<2x1x32xf32, #tpu.memory_space<vmem>>, vector<1x1x32xf32>
    %86 = vector.shape_cast %85 : vector<1x1x32xf32> to vector<1x32xf32>
    %87 = vector.broadcast %86 : vector<1x32xf32> to vector<8x32xf32>
    %88 = arith.addf %84, %87 : vector<8x32xf32>
    %c1_63 = arith.constant 1 : index
    %c0_64 = arith.constant 0 : index
    %c0_65 = arith.constant 0 : index
    %89 = vector.load %arg9[%c1_63, %c0_64, %c0_65] : memref<2x128x32xf32, #tpu.memory_space<vmem>>, vector<1x128x32xf32>
    %90 = vector.shape_cast %89 : vector<1x128x32xf32> to vector<128x32xf32>
    %cst_66 = arith.constant dense<0.000000e+00> : vector<8x32xf32>
    %91 = tpu.matmul %81, %90, %cst_66 {dimension_numbers = #tpu.dot_dimension_numbers<[1], [0], [0], [1], [0, 0, 1, 1], [], []>} : vector<8x128xf32>, vector<128x32xf32>, vector<8x32xf32> -> vector<8x32xf32>
    %c1_67 = arith.constant 1 : index
    %c0_68 = arith.constant 0 : index
    %c0_69 = arith.constant 0 : index
    %92 = vector.load %arg10[%c1_67, %c0_68, %c0_69] : memref<2x1x32xf32, #tpu.memory_space<vmem>>, vector<1x1x32xf32>
    %93 = vector.shape_cast %92 : vector<1x1x32xf32> to vector<1x32xf32>
    %94 = vector.broadcast %93 : vector<1x32xf32> to vector<8x32xf32>
    %95 = arith.addf %91, %94 : vector<8x32xf32>
    %96 = arith.negf %95 : vector<8x32xf32>
    %97 = math.exp %96 : vector<8x32xf32>
    %cst_70 = arith.constant 1.000000e+00 : f32
    %98 = vector.broadcast %cst_70 : f32 to vector<8x32xf32>
    %99 = arith.addf %98, %97 : vector<8x32xf32>
    %100 = arith.divf %98, %99 : vector<8x32xf32>
    %101 = arith.mulf %57, %100 : vector<8x32xf32>
    %cst_71 = arith.constant 1.000000e+00 : f32
    %102 = vector.broadcast %cst_71 : f32 to vector<8x32xf32>
    %103 = arith.subf %102, %100 : vector<8x32xf32>
    %104 = arith.mulf %103, %88 : vector<8x32xf32>
    %105 = arith.addf %101, %104 : vector<8x32xf32>
    %106 = vector.extract_strided_slice %105 {offsets = [7, 0], sizes = [1, 32], strides = [1, 1]} : vector<8x32xf32> to vector<1x32xf32>
    %c0_72 = arith.constant 0 : index
    %c0_73 = arith.constant 0 : index
    %107 = vector.load %arg11[%c0_72, %c0_73] : memref<8x32xf32, #tpu.memory_space<vmem>>, vector<8x32xf32>
    %c0_74 = arith.constant 0 : index
    %c0_75 = arith.constant 0 : index
    %108 = vector.load %arg13[%c0_74, %c0_75] : memref<32x16xf32, #tpu.memory_space<vmem>>, vector<32x16xf32>
    %109 = arith.negf %108 : vector<32x16xf32>
    %110 = math.exp %109 : vector<32x16xf32>
    %cst_76 = arith.constant 1.000000e+00 : f32
    %111 = vector.broadcast %cst_76 : f32 to vector<32x16xf32>
    %112 = arith.addf %111, %110 : vector<32x16xf32>
    %113 = arith.divf %111, %112 : vector<32x16xf32>
    %c0_77 = arith.constant 0 : index
    %c0_78 = arith.constant 0 : index
    %114 = vector.load %arg14[%c0_77, %c0_78] : memref<32x16xf32, #tpu.memory_space<vmem>>, vector<32x16xf32>
    %cst_79 = arith.constant 0.000000e+00 : f32
    %115 = vector.broadcast %cst_79 : f32 to vector<32x16xf32>
    %116 = arith.maximumf %114, %115 : vector<32x16xf32>
    %117 = math.absf %114 : vector<32x16xf32>
    %cst_80 = arith.constant 0.000000e+00 : f32
    %118 = vector.broadcast %cst_80 : f32 to vector<32x16xf32>
    %119 = arith.subf %118, %117 : vector<32x16xf32>
    %120 = math.exp %119 : vector<32x16xf32>
    %121 = math.log1p %120 : vector<32x16xf32>
    %122 = arith.addf %116, %121 : vector<32x16xf32>
    %c0_81 = arith.constant 0 : index
    %c0_82 = arith.constant 0 : index
    %123 = vector.load %arg12[%c0_81, %c0_82] : memref<32x16xf32, #tpu.memory_space<vmem>>, vector<32x16xf32>
    %124 = vector.broadcast %106 : vector<1x32xf32> to vector<8x32xf32>
    %125 = arith.mulf %107, %124 : vector<8x32xf32>
    %126 = arith.mulf %123, %113 : vector<32x16xf32>
    %cst_83 = arith.constant dense<0.000000e+00> : vector<8x16xf32>
    %127 = tpu.matmul %125, %126, %cst_83 {dimension_numbers = #tpu.dot_dimension_numbers<[1], [0], [0], [1], [0, 0, 1, 1], [], []>} : vector<8x32xf32>, vector<32x16xf32>, vector<8x16xf32> -> vector<8x16xf32>
    %c0_84 = arith.constant 0 : index
    %c0_85 = arith.constant 0 : index
    %128 = vector.load %arg15[%c0_84, %c0_85] : memref<1x16xf32, #tpu.memory_space<vmem>>, vector<1x16xf32>
    %129 = vector.broadcast %128 : vector<1x16xf32> to vector<8x16xf32>
    %130 = arith.addf %127, %129 : vector<8x16xf32>
    %c0_86 = arith.constant 0 : index
    %c0_87 = arith.constant 0 : index
    %131 = vector.load %arg16[%c0_86, %c0_87] : memref<1x16xf32, #tpu.memory_space<vmem>>, vector<1x16xf32>
    %cst_88 = arith.constant 0.000000e+00 : f32
    %132 = vector.broadcast %cst_88 : f32 to vector<1x16xf32>
    %133 = arith.maximumf %131, %132 : vector<1x16xf32>
    %134 = math.absf %131 : vector<1x16xf32>
    %cst_89 = arith.constant 0.000000e+00 : f32
    %135 = vector.broadcast %cst_89 : f32 to vector<1x16xf32>
    %136 = arith.subf %135, %134 : vector<1x16xf32>
    %137 = math.exp %136 : vector<1x16xf32>
    %138 = math.log1p %137 : vector<1x16xf32>
    %139 = arith.addf %133, %138 : vector<1x16xf32>
    %140 = arith.mulf %107, %107 : vector<8x32xf32>
    %141 = arith.mulf %122, %122 : vector<32x16xf32>
    %142 = arith.mulf %113, %141 : vector<32x16xf32>
    %cst_90 = arith.constant dense<0.000000e+00> : vector<8x16xf32>
    %143 = tpu.matmul %140, %142, %cst_90 {dimension_numbers = #tpu.dot_dimension_numbers<[1], [0], [0], [1], [0, 0, 1, 1], [], []>} : vector<8x32xf32>, vector<32x16xf32>, vector<8x16xf32> -> vector<8x16xf32>
    %144 = arith.mulf %125, %125 : vector<8x32xf32>
    %cst_91 = arith.constant 1.000000e+00 : f32
    %145 = vector.broadcast %cst_91 : f32 to vector<32x16xf32>
    %146 = arith.subf %145, %113 : vector<32x16xf32>
    %147 = arith.mulf %113, %146 : vector<32x16xf32>
    %148 = arith.mulf %123, %123 : vector<32x16xf32>
    %149 = arith.mulf %147, %148 : vector<32x16xf32>
    %cst_92 = arith.constant dense<0.000000e+00> : vector<8x16xf32>
    %150 = tpu.matmul %144, %149, %cst_92 {dimension_numbers = #tpu.dot_dimension_numbers<[1], [0], [0], [1], [0, 0, 1, 1], [], []>} : vector<8x32xf32>, vector<32x16xf32>, vector<8x16xf32> -> vector<8x16xf32>
    %151 = arith.addf %143, %150 : vector<8x16xf32>
    %152 = arith.mulf %139, %139 : vector<1x16xf32>
    %153 = vector.broadcast %152 : vector<1x16xf32> to vector<8x16xf32>
    %154 = arith.addf %151, %153 : vector<8x16xf32>
    %155 = math.sqrt %154 : vector<8x16xf32>
    %c0_93 = arith.constant 0 : index
    %c0_94 = arith.constant 0 : index
    %156 = vector.load %arg17[%c0_93, %c0_94] : memref<8x16xf32, #tpu.memory_space<vmem>>, vector<8x16xf32>
    %157 = arith.mulf %155, %156 : vector<8x16xf32>
    %158 = arith.addf %130, %157 : vector<8x16xf32>
    %c0_95 = arith.constant 0 : index
    %c0_96 = arith.constant 0 : index
    %159 = vector.load %arg18[%c0_95, %c0_96] : memref<8x16xf32, #tpu.memory_space<vmem>>, vector<8x16xf32>
    tpu.vector_store %arg18[%c0_95, %c0_96], %158 {strides = array<i32>} : memref<8x16xf32, #tpu.memory_space<vmem>>, vector<8x16xf32>,
    return
  }
}

</mosaic_0001>

<llo_original>
// kernel: fused_forward.1
$region0: #{fused_forward.1}
  #allocation0 [shape = 'u32[]', space=smem, size = 0x4, offset = 0x4, fixed_abs, tag = 'smem constant byte address 0x4 - core index']
  #allocation1 [shape = 'u32[144,128]{1,0:T(1,128)}', space=vmem, size = 0x12000, scoped, tag = 'internal scratch']
  %s0 = inlined_call_operand.vmem [shape: f32[1,32], index: 0, kind: input, shape index: {}]
  %s1 = inlined_call_operand.vmem [shape: f32[1,32], index: 1, kind: input, shape index: {}]
  %s2 = inlined_call_operand.vmem [shape: f32[8,32], index: 2, kind: input, shape index: {}]
  %s3 = inlined_call_operand.vmem [shape: f32[2,32,128], index: 3, kind: input, shape index: {}]
  %s4 = inlined_call_operand.vmem [shape: f32[2,1,128], index: 4, kind: input, shape index: {}]
  %s5 = inlined_call_operand.vmem [shape: f32[2,128,128], index: 5, kind: input, shape index: {}]
  %s6 = inlined_call_operand.vmem [shape: f32[2,1,128], index: 6, kind: input, shape index: {}]
  %s7 = inlined_call_operand.vmem [shape: f32[2,128,32], index: 7, kind: input, shape index: {}]
  %s8 = inlined_call_operand.vmem [shape: f32[2,1,32], index: 8, kind: input, shape index: {}]
  %s9 = inlined_call_operand.vmem [shape: f32[2,128,32], index: 9, kind: input, shape index: {}]
  %s10 = inlined_call_operand.vmem [shape: f32[2,1,32], index: 10, kind: input, shape index: {}]
  %s11 = inlined_call_operand.vmem [shape: f32[8,32], index: 11, kind: input, shape index: {}]
  %s12 = inlined_call_operand.vmem [shape: f32[32,16], index: 12, kind: input, shape index: {}]
  %s13 = inlined_call_operand.vmem [shape: f32[32,16], index: 13, kind: input, shape index: {}]
  %s14 = inlined_call_operand.vmem [shape: f32[32,16], index: 14, kind: input, shape index: {}]
  %s15 = inlined_call_operand.vmem [shape: f32[1,16], index: 15, kind: input, shape index: {}]
  %s16 = inlined_call_operand.vmem [shape: f32[1,16], index: 16, kind: input, shape index: {}]
  %s17 = inlined_call_operand.vmem [shape: f32[8,16], index: 17, kind: input, shape index: {}]
  %s18 = inlined_call_operand.hbm [shape: f32[8,16], index: 18, kind: output, shape index: {}]
  %s19 = sld [smem:[#allocation0]]
  $region82: #{fused_forward.1} parent=0
    _
  %s21 = ssub.s32 1, %s19
  %s22 = scalar_select 0, %s21, %s19
  $region1: #{fused_forward.1} parent=0
    #allocation2 [shape = 'u8[4096]{0}', space=vmem, size = 0x1000, scoped, tag = 'output window, operand 0, single buffered']
    #allocation3 [shape = 's32[1]{0}', space=sflag, size = 0x4, scoped, tag = 'scoped memory for fused_forward.1']
    %23 = vsyncpa [#allocation3], 0
    // Predicated region
    $region2: #{fused_forward.1} parent=1 // pred_check
      _
    $region3: #{fused_forward.1} parent=1 // pred_check_branch
      %25 = sbr.rel (0) target = $region5
    $region4: #{fused_forward.1} parent=1 // pred_region
      _
    $region5: #{fused_forward.1} parent=1 // pred_fallthru
      _
    // Predicated region
    $region6: #{fused_forward.1} parent=1 // pred_check
      _
    $region7: #{fused_forward.1} parent=1 // pred_check_branch
      %27 = sbr.rel (0) target = $region9
    $region8: #{fused_forward.1} parent=1 // pred_region
      _
    $region9: #{fused_forward.1} parent=1 // pred_fallthru
      _
    // Predicated region
    $region10: #{fused_forward.1} parent=1 // pred_check
      _
    $region11: #{fused_forward.1} parent=1 // pred_check_branch
      %29 = sbr.rel (0) target = $region13
    $region12: #{fused_forward.1} parent=1 // pred_region
      _
    $region13: #{fused_forward.1} parent=1 // pred_fallthru
      _
    // Predicated region
    $region14: #{fused_forward.1} parent=1 // pred_check
      _
    $region15: #{fused_forward.1} parent=1 // pred_check_branch
      %31 = sbr.rel (0) target = $region17
    $region16: #{fused_forward.1} parent=1 // pred_region
      _
    $region17: #{fused_forward.1} parent=1 // pred_fallthru
      _
    // Predicated region
    $region18: #{fused_forward.1} parent=1 // pred_check
      _
    $region19: #{fused_forward.1} parent=1 // pred_check_branch
      %33 = sbr.rel (0) target = $region21
    $region20: #{fused_forward.1} parent=1 // pred_region
      _
    $region21: #{fused_forward.1} parent=1 // pred_fallthru
      _
    // Predicated region
    $region22: #{fused_forward.1} parent=1 // pred_check
      _
    $region23: #{fused_forward.1} parent=1 // pred_check_branch
      %35 = sbr.rel (0) target = $region25
    $region24: #{fused_forward.1} parent=1 // pred_region
      _
    $region25: #{fused_forward.1} parent=1 // pred_fallthru
      _
    // Predicated region
    $region26: #{fused_forward.1} parent=1 // pred_check
      _
    $region27: #{fused_forward.1} parent=1 // pred_check_branch
      %37 = sbr.rel (0) target = $region29
    $region28: #{fused_forward.1} parent=1 // pred_region
      _
    $region29: #{fused_forward.1} parent=1 // pred_fallthru
      _
    // Predicated region
    $region30: #{fused_forward.1} parent=1 // pred_check
      _
    $region31: #{fused_forward.1} parent=1 // pred_check_branch
      %39 = sbr.rel (0) target = $region33
    $region32: #{fused_forward.1} parent=1 // pred_region
      _
    $region33: #{fused_forward.1} parent=1 // pred_fallthru
      _
    // Predicated region
    $region34: #{fused_forward.1} parent=1 // pred_check
      _
    $region35: #{fused_forward.1} parent=1 // pred_check_branch
      %41 = sbr.rel (0) target = $region37
    $region36: #{fused_forward.1} parent=1 // pred_region
      _
    $region37: #{fused_forward.1} parent=1 // pred_fallthru
      _
    // Predicated region
    $region38: #{fused_forward.1} parent=1 // pred_check
      _
    $region39: #{fused_forward.1} parent=1 // pred_check_branch
      %43 = sbr.rel (0) target = $region41
    $region40: #{fused_forward.1} parent=1 // pred_region
      _
    $region41: #{fused_forward.1} parent=1 // pred_fallthru
      _
    // Predicated region
    $region42: #{fused_forward.1} parent=1 // pred_check
      _
    $region43: #{fused_forward.1} parent=1 // pred_check_branch
      %45 = sbr.rel (0) target = $region45
    $region44: #{fused_forward.1} parent=1 // pred_region
      _
    $region45: #{fused_forward.1} parent=1 // pred_fallthru
      _
    // Predicated region
    $region46: #{fused_forward.1} parent=1 // pred_check
      _
    $region47: #{fused_forward.1} parent=1 // pred_check_branch
      %47 = sbr.rel (0) target = $region49
    $region48: #{fused_forward.1} parent=1 // pred_region
      _
    $region49: #{fused_forward.1} parent=1 // pred_fallthru
      _
    // Predicated region
    $region50: #{fused_forward.1} parent=1 // pred_check
      _
    $region51: #{fused_forward.1} parent=1 // pred_check_branch
      %49 = sbr.rel (0) target = $region53
    $region52: #{fused_forward.1} parent=1 // pred_region
      _
    $region53: #{fused_forward.1} parent=1 // pred_fallthru
      _
    // Predicated region
    $region54: #{fused_forward.1} parent=1 // pred_check
      _
    $region55: #{fused_forward.1} parent=1 // pred_check_branch
      %51 = sbr.rel (0) target = $region57
    $region56: #{fused_forward.1} parent=1 // pred_region
      _
    $region57: #{fused_forward.1} parent=1 // pred_fallthru
      _
    // Predicated region
    $region58: #{fused_forward.1} parent=1 // pred_check
      _
    $region59: #{fused_forward.1} parent=1 // pred_check_branch
      %53 = sbr.rel (0) target = $region61
    $region60: #{fused_forward.1} parent=1 // pred_region
      _
    $region61: #{fused_forward.1} parent=1 // pred_fallthru
      _
    // Predicated region
    $region62: #{fused_forward.1} parent=1 // pred_check
      _
    $region63: #{fused_forward.1} parent=1 // pred_check_branch
      %55 = sbr.rel (0) target = $region65
    $region64: #{fused_forward.1} parent=1 // pred_region
      _
    $region65: #{fused_forward.1} parent=1 // pred_fallthru
      _
    // Predicated region
    $region66: #{fused_forward.1} parent=1 // pred_check
      _
    $region67: #{fused_forward.1} parent=1 // pred_check_branch
      %57 = sbr.rel (0) target = $region69
    $region68: #{fused_forward.1} parent=1 // pred_region
      _
    $region69: #{fused_forward.1} parent=1 // pred_fallthru
      _
    // Predicated region
    $region70: #{fused_forward.1} parent=1 // pred_check
      _
    $region71: #{fused_forward.1} parent=1 // pred_check_branch
      %59 = sbr.rel (0) target = $region73
    $region72: #{fused_forward.1} parent=1 // pred_region
      _
    $region73: #{fused_forward.1} parent=1 // pred_fallthru
      _
    %v60 = vld [vmem:[%s1] sm:$0x1]
    %v61 = vmul.f32 %v60, 0.5
    %v62 = vmul.f32 %v61, 1.442695
    %v63 = vpow.pop %v62
    %v64 = vld [vmem:[%s0] sm:$0x1]
    %v65 = vld [vmem:[%s2] sm:$0xff]
    %v67 = vlaneseq
    %v68 = vshrl.u32 %v67, 7
    %v69 = vsub.s32 0, %v68
    %v70 = vrot.slane %v63, %v69
    %v72 = vmul.f32 %v70, %v65
    %v74 = vlaneseq
    %v75 = vshrl.u32 %v74, 7
    %v76 = vsub.s32 0, %v75
    %v77 = vrot.slane %v64, %v76
    %v79 = vadd.f32 %v77, %v72
    %v80 = vld [vmem:[%s3] sm:$0xff]
    %v81 = vld [vmem:[%s3 + $0x8] sm:$0xff]
    %v82 = vld [vmem:[%s3 + $0x10] sm:$0xff]
    %v83 = vld [vmem:[%s3 + $0x18] sm:$0xff]
    %v84 = vld [vmem:[%s4] sm:$0x1]
    %v86 = vlaneseq
    %v87 = vshrl.u32 %v86, 7
    %v88 = vsub.s32 0, %v87
    %v89 = vrot.slane %v84, %v88
    %vm91 = vcmask 261120
    %v93 = vsel %vm91, %v79, 0
    %95 = vmatprep.subr.mxu0 0.0
    %96 = vmatpush1.msra.mxu0 0.0
    %97 = vmatprep.subr.mxu0 0.0
    %98 = vmatpush1.msra.mxu0 0.0
    %99 = vmatprep.subr.mxu0 0.0
    %100 = vmatpush1.msra.mxu0 0.0
    %101 = vmatprep.subr.mxu0 0.0
    %102 = vmatpush1.msra.mxu0 0.0
    %103 = vmatprep.subr.mxu0 0.0
    %104 = vmatpush1.msra.mxu0 0.0
    %105 = vmatprep.subr.mxu0 0.0
    %106 = vmatpush1.msra.mxu0 0.0
    %107 = vmatprep.subr.mxu0 0.0
    %108 = vmatpush1.msra.mxu0 0.0
    %109 = vmatprep.subr.mxu0 0.0
    %110 = vmatpush1.msra.mxu0 0.0
    %111 = vmatprep.subr.mxu0 0.0
    %112 = vmatpush1.msra.mxu0 0.0
    %113 = vmatprep.subr.mxu0 0.0
    %114 = vmatpush1.msra.mxu0 0.0
    %115 = vmatprep.subr.mxu0 0.0
    %116 = vmatpush1.msra.mxu0 0.0
    %117 = vmatprep.subr.mxu0 0.0
    %118 = vmatpush1.msra.mxu0 0.0
    %119 = vmatprep.subr.mxu0 0.0
    %120 = vmatpush1.msra.mxu0 %v83
    %121 = vmatprep.subr.mxu0 0.0
    %122 = vmatpush1.msra.mxu0 %v82
    %123 = vmatprep.subr.mxu0 0.0
    %124 = vmatpush1.msra.mxu0 %v81
    %125 = vmatprep.subr.mxu0 0.0
    %126 = vmatpush1.msra.mxu0 %v80
    %127 = vmatprep.subr.mxu0 0.0
    %128 = vmatpush2.msra.mxu0 0.0
    %129 = vmatprep.subr.mxu0 0.0
    %130 = vmatpush2.msra.mxu0 0.0
    %131 = vmatprep.subr.mxu0 0.0
    %132 = vmatpush2.msra.mxu0 0.0
    %133 = vmatprep.subr.mxu0 0.0
    %134 = vmatpush2.msra.mxu0 0.0
    %135 = vmatprep.subr.mxu0 0.0
    %136 = vmatpush2.msra.mxu0 0.0
    %137 = vmatprep.subr.mxu0 0.0
    %138 = vmatpush2.msra.mxu0 0.0
    %139 = vmatprep.subr.mxu0 0.0
    %140 = vmatpush2.msra.mxu0 0.0
    %141 = vmatprep.subr.mxu0 0.0
    %142 = vmatpush2.msra.mxu0 0.0
    %143 = vmatprep.subr.mxu0 0.0
    %144 = vmatpush2.msra.mxu0 0.0
    %145 = vmatprep.subr.mxu0 0.0
    %146 = vmatpush2.msra.mxu0 0.0
    %147 = vmatprep.subr.mxu0 0.0
    %148 = vmatpush2.msra.mxu0 0.0
    %149 = vmatprep.subr.mxu0 0.0
    %150 = vmatpush2.msra.mxu0 0.0
    %151 = vmatprep.subr.mxu0 0.0
    %152 = vmatpush2.msra.mxu0 0.0
    %153 = vmatprep.subr.mxu0 0.0
    %154 = vmatpush2.msra.mxu0 0.0
    %155 = vmatprep.subr.mxu0 0.0
    %156 = vmatpush2.msra.mxu0 0.0
    %157 = vmatprep.subr.mxu0 0.0
    %158 = vmatpush2.msra.mxu0 0.0
    %159 = vmatprep.mubr.f32.mxu0 0.0
    %160 = vmatmul.mubr.f32.gmra.mxu0 %v93
    %v161 = vpop.f32.mrf.mxu0
    %v162 = vadd.f32 %v89, %v161
    %v163 = vpop.f32.mrf.mxu0
    %164 = vdwg.mxu0
    %vm165 = vcmp.ge.f32.partialorder %v162, 0.0
    %v166 = vmul.f32 %v162, 0.1
    %v167 = vsel %vm165, %v162, %v166
    %v168 = vld [vmem:[%s5] sm:$0xff]
    %v169 = vld [vmem:[%s5 + $0x8] sm:$0xff]
    %v170 = vld [vmem:[%s5 + $0x10] sm:$0xff]
    %v171 = vld [vmem:[%s5 + $0x18] sm:$0xff]
    %v172 = vld [vmem:[%s5 + $0x20] sm:$0xff]
    %v173 = vld [vmem:[%s5 + $0x28] sm:$0xff]
    %v174 = vld [vmem:[%s5 + $0x30] sm:$0xff]
    %v175 = vld [vmem:[%s5 + $0x38] sm:$0xff]
    %v176 = vld [vmem:[%s5 + $0x40] sm:$0xff]
    %v177 = vld [vmem:[%s5 + $0x48] sm:$0xff]
    %v178 = vld [vmem:[%s5 + $0x50] sm:$0xff]
    %v179 = vld [vmem:[%s5 + $0x58] sm:$0xff]
    %v180 = vld [vmem:[%s5 + $0x60] sm:$0xff]
    %v181 = vld [vmem:[%s5 + $0x68] sm:$0xff]
    %v182 = vld [vmem:[%s5 + $0x70] sm:$0xff]
    %v183 = vld [vmem:[%s5 + $0x78] sm:$0xff]
    %v184 = vld [vmem:[%s6] sm:$0x1]
    %v186 = vlaneseq
    %v187 = vshrl.u32 %v186, 7
    %v188 = vsub.s32 0, %v187
    %v189 = vrot.slane %v184, %v188
    %191 = vmatprep.subr.mxu0 0.0
    %192 = vmatpush1.msra.mxu0 %v183
    %193 = vmatprep.subr.mxu0 0.0
    %194 = vmatpush1.msra.mxu0 %v182
    %195 = vmatprep.subr.mxu0 0.0
    %196 = vmatpush1.msra.mxu0 %v181
    %197 = vmatprep.subr.mxu0 0.0
    %198 = vmatpush1.msra.mxu0 %v180
    %199 = vmatprep.subr.mxu0 0.0
    %200 = vmatpush1.msra.mxu0 %v179
    %201 = vmatprep.subr.mxu0 0.0
    %202 = vmatpush1.msra.mxu0 %v178
    %203 = vmatprep.subr.mxu0 0.0
    %204 = vmatpush1.msra.mxu0 %v177
    %205 = vmatprep.subr.mxu0 0.0
    %206 = vmatpush1.msra.mxu0 %v176
    %207 = vmatprep.subr.mxu0 0.0
    %208 = vmatpush1.msra.mxu0 %v175
    %209 = vmatprep.subr.mxu0 0.0
    %210 = vmatpush1.msra.mxu0 %v174
    %211 = vmatprep.subr.mxu0 0.0
    %212 = vmatpush1.msra.mxu0 %v173
    %213 = vmatprep.subr.mxu0 0.0
    %214 = vmatpush1.msra.mxu0 %v172
    %215 = vmatprep.subr.mxu0 0.0
    %216 = vmatpush1.msra.mxu0 %v171
    %217 = vmatprep.subr.mxu0 0.0
    %218 = vmatpush1.msra.mxu0 %v170
    %219 = vmatprep.subr.mxu0 0.0
    %220 = vmatpush1.msra.mxu0 %v169
    %221 = vmatprep.subr.mxu0 0.0
    %222 = vmatpush1.msra.mxu0 %v168
    %223 = vmatprep.subr.mxu0 0.0
    %224 = vmatpush2.msra.mxu0 0.0
    %225 = vmatprep.subr.mxu0 0.0
    %226 = vmatpush2.msra.mxu0 0.0
    %227 = vmatprep.subr.mxu0 0.0
    %228 = vmatpush2.msra.mxu0 0.0
    %229 = vmatprep.subr.mxu0 0.0
    %230 = vmatpush2.msra.mxu0 0.0
    %231 = vmatprep.subr.mxu0 0.0
    %232 = vmatpush2.msra.mxu0 0.0
    %233 = vmatprep.subr.mxu0 0.0
    %234 = vmatpush2.msra.mxu0 0.0
    %235 = vmatprep.subr.mxu0 0.0
    %236 = vmatpush2.msra.mxu0 0.0
    %237 = vmatprep.subr.mxu0 0.0
    %238 = vmatpush2.msra.mxu0 0.0
    %239 = vmatprep.subr.mxu0 0.0
    %240 = vmatpush2.msra.mxu0 0.0
    %241 = vmatprep.subr.mxu0 0.0
    %242 = vmatpush2.msra.mxu0 0.0
    %243 = vmatprep.subr.mxu0 0.0
    %244 = vmatpush2.msra.mxu0 0.0
    %245 = vmatprep.subr.mxu0 0.0
    %246 = vmatpush2.msra.mxu0 0.0
    %247 = vmatprep.subr.mxu0 0.0
    %248 = vmatpush2.msra.mxu0 0.0
    %249 = vmatprep.subr.mxu0 0.0
    %250 = vmatpush2.msra.mxu0 0.0
    %251 = vmatprep.subr.mxu0 0.0
    %252 = vmatpush2.msra.mxu0 0.0
    %253 = vmatprep.subr.mxu0 0.0
    %254 = vmatpush2.msra.mxu0 0.0
    %255 = vmatprep.mubr.f32.mxu0 0.0
    %256 = vmatmul.mubr.f32.gmra.mxu0 %v167
    %v257 = vpop.f32.mrf.mxu0
    %v258 = vadd.f32 %v189, %v257
    %v259 = vpop.f32.mrf.mxu0
    %260 = vdwg.mxu0
    %vm261 = vcmp.ge.f32.partialorder %v258, 0.0
    %v262 = vmul.f32 %v258, 0.1
    %v263 = vsel %vm261, %v258, %v262
    %v264 = vld [vmem:[%s7] sm:$0xff]
    %v265 = vld [vmem:[%s7 + $0x8] sm:$0xff]
    %v266 = vld [vmem:[%s7 + $0x10] sm:$0xff]
    %v267 = vld [vmem:[%s7 + $0x18] sm:$0xff]
    %v268 = vld [vmem:[%s7 + $0x20] sm:$0xff]
    %v269 = vld [vmem:[%s7 + $0x28] sm:$0xff]
    %v270 = vld [vmem:[%s7 + $0x30] sm:$0xff]
    %v271 = vld [vmem:[%s7 + $0x38] sm:$0xff]
    %v272 = vld [vmem:[%s7 + $0x40] sm:$0xff]
    %v273 = vld [vmem:[%s7 + $0x48] sm:$0xff]
    %v274 = vld [vmem:[%s7 + $0x50] sm:$0xff]
    %v275 = vld [vmem:[%s7 + $0x58] sm:$0xff]
    %v276 = vld [vmem:[%s7 + $0x60] sm:$0xff]
    %v277 = vld [vmem:[%s7 + $0x68] sm:$0xff]
    %v278 = vld [vmem:[%s7 + $0x70] sm:$0xff]
    %v279 = vld [vmem:[%s7 + $0x78] sm:$0xff]
    %v280 = vld [vmem:[%s8] sm:$0x1]
    %v282 = vlaneseq
    %v283 = vshrl.u32 %v282, 7
    %v284 = vsub.s32 0, %v283
    %v285 = vrot.slane %v280, %v284
    %287 = vmatprep.subr.mxu0 0.0
    %288 = vmatpush1.msra.mxu0 %v279
    %289 = vmatprep.subr.mxu0 0.0
    %290 = vmatpush1.msra.mxu0 %v278
    %291 = vmatprep.subr.mxu0 0.0
    %292 = vmatpush1.msra.mxu0 %v277
    %293 = vmatprep.subr.mxu0 0.0
    %294 = vmatpush1.msra.mxu0 %v276
    %295 = vmatprep.subr.mxu0 0.0
    %296 = vmatpush1.msra.mxu0 %v275
    %297 = vmatprep.subr.mxu0 0.0
    %298 = vmatpush1.msra.mxu0 %v274
    %299 = vmatprep.subr.mxu0 0.0
    %300 = vmatpush1.msra.mxu0 %v273
    %301 = vmatprep.subr.mxu0 0.0
    %302 = vmatpush1.msra.mxu0 %v272
    %303 = vmatprep.subr.mxu0 0.0
    %304 = vmatpush1.msra.mxu0 %v271
    %305 = vmatprep.subr.mxu0 0.0
    %306 = vmatpush1.msra.mxu0 %v270
    %307 = vmatprep.subr.mxu0 0.0
    %308 = vmatpush1.msra.mxu0 %v269
    %309 = vmatprep.subr.mxu0 0.0
    %310 = vmatpush1.msra.mxu0 %v268
    %311 = vmatprep.subr.mxu0 0.0
    %312 = vmatpush1.msra.mxu0 %v267
    %313 = vmatprep.subr.mxu0 0.0
    %314 = vmatpush1.msra.mxu0 %v266
    %315 = vmatprep.subr.mxu0 0.0
    %316 = vmatpush1.msra.mxu0 %v265
    %317 = vmatprep.subr.mxu0 0.0
    %318 = vmatpush1.msra.mxu0 %v264
    %319 = vmatprep.subr.mxu0 0.0
    %320 = vmatpush2.msra.mxu0 0.0
    %321 = vmatprep.subr.mxu0 0.0
    %322 = vmatpush2.msra.mxu0 0.0
    %323 = vmatprep.subr.mxu0 0.0
    %324 = vmatpush2.msra.mxu0 0.0
    %325 = vmatprep.subr.mxu0 0.0
    %326 = vmatpush2.msra.mxu0 0.0
    %327 = vmatprep.subr.mxu0 0.0
    %328 = vmatpush2.msra.mxu0 0.0
    %329 = vmatprep.subr.mxu0 0.0
    %330 = vmatpush2.msra.mxu0 0.0
    %331 = vmatprep.subr.mxu0 0.0
    %332 = vmatpush2.msra.mxu0 0.0
    %333 = vmatprep.subr.mxu0 0.0
    %334 = vmatpush2.msra.mxu0 0.0
    %335 = vmatprep.subr.mxu0 0.0
    %336 = vmatpush2.msra.mxu0 0.0
    %337 = vmatprep.subr.mxu0 0.0
    %338 = vmatpush2.msra.mxu0 0.0
    %339 = vmatprep.subr.mxu0 0.0
    %340 = vmatpush2.msra.mxu0 0.0
    %341 = vmatprep.subr.mxu0 0.0
    %342 = vmatpush2.msra.mxu0 0.0
    %343 = vmatprep.subr.mxu0 0.0
    %344 = vmatpush2.msra.mxu0 0.0
    %345 = vmatprep.subr.mxu0 0.0
    %346 = vmatpush2.msra.mxu0 0.0
    %347 = vmatprep.subr.mxu0 0.0
    %348 = vmatpush2.msra.mxu0 0.0
    %349 = vmatprep.subr.mxu0 0.0
    %350 = vmatpush2.msra.mxu0 0.0
    %351 = vmatprep.mubr.f32.mxu0 0.0
    %352 = vmatmul.mubr.f32.gmra.mxu0 %v263
    %v353 = vpop.f32.mrf.mxu0
    %v354 = vadd.f32 %v285, %v353
    %v355 = vpop.f32.mrf.mxu0
    %356 = vdwg.mxu0
    %v357 = vld [vmem:[%s9] sm:$0xff]
    %v358 = vld [vmem:[%s9 + $0x8] sm:$0xff]
    %v359 = vld [vmem:[%s9 + $0x10] sm:$0xff]
    %v360 = vld [vmem:[%s9 + $0x18] sm:$0xff]
    %v361 = vld [vmem:[%s9 + $0x20] sm:$0xff]
    %v362 = vld [vmem:[%s9 + $0x28] sm:$0xff]
    %v363 = vld [vmem:[%s9 + $0x30] sm:$0xff]
    %v364 = vld [vmem:[%s9 + $0x38] sm:$0xff]
    %v365 = vld [vmem:[%s9 + $0x40] sm:$0xff]
    %v366 = vld [vmem:[%s9 + $0x48] sm:$0xff]
    %v367 = vld [vmem:[%s9 + $0x50] sm:$0xff]
    %v368 = vld [vmem:[%s9 + $0x58] sm:$0xff]
    %v369 = vld [vmem:[%s9 + $0x60] sm:$0xff]
    %v370 = vld [vmem:[%s9 + $0x68] sm:$0xff]
    %v371 = vld [vmem:[%s9 + $0x70] sm:$0xff]
    %v372 = vld [vmem:[%s9 + $0x78] sm:$0xff]
    %v373 = vld [vmem:[%s10] sm:$0x1]
    %v375 = vlaneseq
    %v376 = vshrl.u32 %v375, 7
    %v377 = vsub.s32 0, %v376
    %v378 = vrot.slane %v373, %v377
    %380 = vmatprep.subr.mxu0 0.0
    %381 = vmatpush1.msra.mxu0 %v372
    %382 = vmatprep.subr.mxu0 0.0
    %383 = vmatpush1.msra.mxu0 %v371
    %384 = vmatprep.subr.mxu0 0.0
    %385 = vmatpush1.msra.mxu0 %v370
    %386 = vmatprep.subr.mxu0 0.0
    %387 = vmatpush1.msra.mxu0 %v369
    %388 = vmatprep.subr.mxu0 0.0
    %389 = vmatpush1.msra.mxu0 %v368
    %390 = vmatprep.subr.mxu0 0.0
    %391 = vmatpush1.msra.mxu0 %v367
    %392 = vmatprep.subr.mxu0 0.0
    %393 = vmatpush1.msra.mxu0 %v366
    %394 = vmatprep.subr.mxu0 0.0
    %395 = vmatpush1.msra.mxu0 %v365
    %396 = vmatprep.subr.mxu0 0.0
    %397 = vmatpush1.msra.mxu0 %v364
    %398 = vmatprep.subr.mxu0 0.0
    %399 = vmatpush1.msra.mxu0 %v363
    %400 = vmatprep.subr.mxu0 0.0
    %401 = vmatpush1.msra.mxu0 %v362
    %402 = vmatprep.subr.mxu0 0.0
    %403 = vmatpush1.msra.mxu0 %v361
    %404 = vmatprep.subr.mxu0 0.0
    %405 = vmatpush1.msra.mxu0 %v360
    %406 = vmatprep.subr.mxu0 0.0
    %407 = vmatpush1.msra.mxu0 %v359
    %408 = vmatprep.subr.mxu0 0.0
    %409 = vmatpush1.msra.mxu0 %v358
    %410 = vmatprep.subr.mxu0 0.0
    %411 = vmatpush1.msra.mxu0 %v357
    %412 = vmatprep.subr.mxu0 0.0
    %413 = vmatpush2.msra.mxu0 0.0
    %414 = vmatprep.subr.mxu0 0.0
    %415 = vmatpush2.msra.mxu0 0.0
    %416 = vmatprep.subr.mxu0 0.0
    %417 = vmatpush2.msra.mxu0 0.0
    %418 = vmatprep.subr.mxu0 0.0
    %419 = vmatpush2.msra.mxu0 0.0
    %420 = vmatprep.subr.mxu0 0.0
    %421 = vmatpush2.msra.mxu0 0.0
    %422 = vmatprep.subr.mxu0 0.0
    %423 = vmatpush2.msra.mxu0 0.0
    %424 = vmatprep.subr.mxu0 0.0
    %425 = vmatpush2.msra.mxu0 0.0
    %426 = vmatprep.subr.mxu0 0.0
    %427 = vmatpush2.msra.mxu0 0.0
    %428 = vmatprep.subr.mxu0 0.0
    %429 = vmatpush2.msra.mxu0 0.0
    %430 = vmatprep.subr.mxu0 0.0
    %431 = vmatpush2.msra.mxu0 0.0
    %432 = vmatprep.subr.mxu0 0.0
    %433 = vmatpush2.msra.mxu0 0.0
    %434 = vmatprep.subr.mxu0 0.0
    %435 = vmatpush2.msra.mxu0 0.0
    %436 = vmatprep.subr.mxu0 0.0
    %437 = vmatpush2.msra.mxu0 0.0
    %438 = vmatprep.subr.mxu0 0.0
    %439 = vmatpush2.msra.mxu0 0.0
    %440 = vmatprep.subr.mxu0 0.0
    %441 = vmatpush2.msra.mxu0 0.0
    %442 = vmatprep.subr.mxu0 0.0
    %443 = vmatpush2.msra.mxu0 0.0
    %444 = vmatprep.mubr.f32.mxu0 0.0
    %445 = vmatmul.mubr.f32.gmra.mxu0 %v263
    %v446 = vpop.f32.mrf.mxu0
    %v447 = vadd.f32 %v378, %v446
    %v448 = vpop.f32.mrf.mxu0
    %449 = vdwg.mxu0
    %v450 = vxor.u32 %v447, 2147483648
    %v451 = vmul.f32 %v450, 1.442695
    %v452 = vpow.pop %v451
    %v453 = vadd.f32 %v452, 1.0
    %v454 = vrcp.pop %v453
    %v455 = vmul.f32 1.0, %v454
    %v456 = vmul.f32 %v79, %v455
    %v457 = vsub.f32 1.0, %v455
    %v458 = vmul.f32 %v457, %v354
    %v459 = vadd.f32 %v456, %v458
    %s460 = scalar_lea.vmem %s3, 32
    %v461 = vld [vmem:[%s460] sm:$0xff]
    %v462 = vld [vmem:[%s460 + $0x8] sm:$0xff]
    %v463 = vld [vmem:[%s460 + $0x10] sm:$0xff]
    %v464 = vld [vmem:[%s460 + $0x18] sm:$0xff]
    %s465 = scalar_lea.vmem %s4, 1
    %v466 = vld [vmem:[%s465] sm:$0x1]
    %v468 = vlaneseq
    %v469 = vshrl.u32 %v468, 7
    %v470 = vsub.s32 0, %v469
    %v471 = vrot.slane %v466, %v470
    %v474 = vsel %vm91, %v459, 0
    %476 = vmatprep.subr.mxu0 0.0
    %477 = vmatpush1.msra.mxu0 0.0
    %478 = vmatprep.subr.mxu0 0.0
    %479 = vmatpush1.msra.mxu0 0.0
    %480 = vmatprep.subr.mxu0 0.0
    %481 = vmatpush1.msra.mxu0 0.0
    %482 = vmatprep.subr.mxu0 0.0
    %483 = vmatpush1.msra.mxu0 0.0
    %484 = vmatprep.subr.mxu0 0.0
    %485 = vmatpush1.msra.mxu0 0.0
    %486 = vmatprep.subr.mxu0 0.0
    %487 = vmatpush1.msra.mxu0 0.0
    %488 = vmatprep.subr.mxu0 0.0
    %489 = vmatpush1.msra.mxu0 0.0
    %490 = vmatprep.subr.mxu0 0.0
    %491 = vmatpush1.msra.mxu0 0.0
    %492 = vmatprep.subr.mxu0 0.0
    %493 = vmatpush1.msra.mxu0 0.0
    %494 = vmatprep.subr.mxu0 0.0
    %495 = vmatpush1.msra.mxu0 0.0
    %496 = vmatprep.subr.mxu0 0.0
    %497 = vmatpush1.msra.mxu0 0.0
    %498 = vmatprep.subr.mxu0 0.0
    %499 = vmatpush1.msra.mxu0 0.0
    %500 = vmatprep.subr.mxu0 0.0
    %501 = vmatpush1.msra.mxu0 %v464
    %502 = vmatprep.subr.mxu0 0.0
    %503 = vmatpush1.msra.mxu0 %v463
    %504 = vmatprep.subr.mxu0 0.0
    %505 = vmatpush1.msra.mxu0 %v462
    %506 = vmatprep.subr.mxu0 0.0
    %507 = vmatpush1.msra.mxu0 %v461
    %508 = vmatprep.subr.mxu0 0.0
    %509 = vmatpush2.msra.mxu0 0.0
    %510 = vmatprep.subr.mxu0 0.0
    %511 = vmatpush2.msra.mxu0 0.0
    %512 = vmatprep.subr.mxu0 0.0
    %513 = vmatpush2.msra.mxu0 0.0
    %514 = vmatprep.subr.mxu0 0.0
    %515 = vmatpush2.msra.mxu0 0.0
    %516 = vmatprep.subr.mxu0 0.0
    %517 = vmatpush2.msra.mxu0 0.0
    %518 = vmatprep.subr.mxu0 0.0
    %519 = vmatpush2.msra.mxu0 0.0
    %520 = vmatprep.subr.mxu0 0.0
    %521 = vmatpush2.msra.mxu0 0.0
    %522 = vmatprep.subr.mxu0 0.0
    %523 = vmatpush2.msra.mxu0 0.0
    %524 = vmatprep.subr.mxu0 0.0
    %525 = vmatpush2.msra.mxu0 0.0
    %526 = vmatprep.subr.mxu0 0.0
    %527 = vmatpush2.msra.mxu0 0.0
    %528 = vmatprep.subr.mxu0 0.0
    %529 = vmatpush2.msra.mxu0 0.0
    %530 = vmatprep.subr.mxu0 0.0
    %531 = vmatpush2.msra.mxu0 0.0
    %532 = vmatprep.subr.mxu0 0.0
    %533 = vmatpush2.msra.mxu0 0.0
    %534 = vmatprep.subr.mxu0 0.0
    %535 = vmatpush2.msra.mxu0 0.0
    %536 = vmatprep.subr.mxu0 0.0
    %537 = vmatpush2.msra.mxu0 0.0
    %538 = vmatprep.subr.mxu0 0.0
    %539 = vmatpush2.msra.mxu0 0.0
    %540 = vmatprep.mubr.f32.mxu0 0.0
    %541 = vmatmul.mubr.f32.gmra.mxu0 %v474
    %v542 = vpop.f32.mrf.mxu0
    %v543 = vadd.f32 %v471, %v542
    %v544 = vpop.f32.mrf.mxu0
    %545 = vdwg.mxu0
    %vm546 = vcmp.ge.f32.partialorder %v543, 0.0
    %v547 = vmul.f32 %v543, 0.1
    %v548 = vsel %vm546, %v543, %v547
    %s549 = scalar_lea.vmem %s5, 128
    %v550 = vld [vmem:[%s549] sm:$0xff]
    %v551 = vld [vmem:[%s549 + $0x8] sm:$0xff]
    %v552 = vld [vmem:[%s549 + $0x10] sm:$0xff]
    %v553 = vld [vmem:[%s549 + $0x18] sm:$0xff]
    %v554 = vld [vmem:[%s549 + $0x20] sm:$0xff]
    %v555 = vld [vmem:[%s549 + $0x28] sm:$0xff]
    %v556 = vld [vmem:[%s549 + $0x30] sm:$0xff]
    %v557 = vld [vmem:[%s549 + $0x38] sm:$0xff]
    %v558 = vld [vmem:[%s549 + $0x40] sm:$0xff]
    %v559 = vld [vmem:[%s549 + $0x48] sm:$0xff]
    %v560 = vld [vmem:[%s549 + $0x50] sm:$0xff]
    %v561 = vld [vmem:[%s549 + $0x58] sm:$0xff]
    %v562 = vld [vmem:[%s549 + $0x60] sm:$0xff]
    %v563 = vld [vmem:[%s549 + $0x68] sm:$0xff]
    %v564 = vld [vmem:[%s549 + $0x70] sm:$0xff]
    %v565 = vld [vmem:[%s549 + $0x78] sm:$0xff]
    %s566 = scalar_lea.vmem %s6, 1
    %v567 = vld [vmem:[%s566] sm:$0x1]
    %v569 = vlaneseq
    %v570 = vshrl.u32 %v569, 7
    %v571 = vsub.s32 0, %v570
    %v572 = vrot.slane %v567, %v571
    %574 = vmatprep.subr.mxu0 0.0
    %575 = vmatpush1.msra.mxu0 %v565
    %576 = vmatprep.subr.mxu0 0.0
    %577 = vmatpush1.msra.mxu0 %v564
    %578 = vmatprep.subr.mxu0 0.0
    %579 = vmatpush1.msra.mxu0 %v563
    %580 = vmatprep.subr.mxu0 0.0
    %581 = vmatpush1.msra.mxu0 %v562
    %582 = vmatprep.subr.mxu0 0.0
    %583 = vmatpush1.msra.mxu0 %v561
    %584 = vmatprep.subr.mxu0 0.0
    %585 = vmatpush1.msra.mxu0 %v560
    %586 = vmatprep.subr.mxu0 0.0
    %587 = vmatpush1.msra.mxu0 %v559
    %588 = vmatprep.subr.mxu0 0.0
    %589 = vmatpush1.msra.mxu0 %v558
    %590 = vmatprep.subr.mxu0 0.0
    %591 = vmatpush1.msra.mxu0 %v557
    %592 = vmatprep.subr.mxu0 0.0
    %593 = vmatpush1.msra.mxu0 %v556
    %594 = vmatprep.subr.mxu0 0.0
    %595 = vmatpush1.msra.mxu0 %v555
    %596 = vmatprep.subr.mxu0 0.0
    %597 = vmatpush1.msra.mxu0 %v554
    %598 = vmatprep.subr.mxu0 0.0
    %599 = vmatpush1.msra.mxu0 %v553
    %600 = vmatprep.subr.mxu0 0.0
    %601 = vmatpush1.msra.mxu0 %v552
    %602 = vmatprep.subr.mxu0 0.0
    %603 = vmatpush1.msra.mxu0 %v551
    %604 = vmatprep.subr.mxu0 0.0
    %605 = vmatpush1.msra.mxu0 %v550
    %606 = vmatprep.subr.mxu0 0.0
    %607 = vmatpush2.msra.mxu0 0.0
    %608 = vmatprep.subr.mxu0 0.0
    %609 = vmatpush2.msra.mxu0 0.0
    %610 = vmatprep.subr.mxu0 0.0
    %611 = vmatpush2.msra.mxu0 0.0
    %612 = vmatprep.subr.mxu0 0.0
    %613 = vmatpush2.msra.mxu0 0.0
    %614 = vmatprep.subr.mxu0 0.0
    %615 = vmatpush2.msra.mxu0 0.0
    %616 = vmatprep.subr.mxu0 0.0
    %617 = vmatpush2.msra.mxu0 0.0
    %618 = vmatprep.subr.mxu0 0.0
    %619 = vmatpush2.msra.mxu0 0.0
    %620 = vmatprep.subr.mxu0 0.0
    %621 = vmatpush2.msra.mxu0 0.0
    %622 = vmatprep.subr.mxu0 0.0
    %623 = vmatpush2.msra.mxu0 0.0
    %624 = vmatprep.subr.mxu0 0.0
    %625 = vmatpush2.msra.mxu0 0.0
    %626 = vmatprep.subr.mxu0 0.0
    %627 = vmatpush2.msra.mxu0 0.0
    %628 = vmatprep.subr.mxu0 0.0
    %629 = vmatpush2.msra.mxu0 0.0
    %630 = vmatprep.subr.mxu0 0.0
    %631 = vmatpush2.msra.mxu0 0.0
    %632 = vmatprep.subr.mxu0 0.0
    %633 = vmatpush2.msra.mxu0 0.0
    %634 = vmatprep.subr.mxu0 0.0
    %635 = vmatpush2.msra.mxu0 0.0
    %636 = vmatprep.subr.mxu0 0.0
    %637 = vmatpush2.msra.mxu0 0.0
    %638 = vmatprep.mubr.f32.mxu0 0.0
    %639 = vmatmul.mubr.f32.gmra.mxu0 %v548
    %v640 = vpop.f32.mrf.mxu0
    %v641 = vadd.f32 %v572, %v640
    %v642 = vpop.f32.mrf.mxu0
    %643 = vdwg.mxu0
    %vm644 = vcmp.ge.f32.partialorder %v641, 0.0
    %v645 = vmul.f32 %v641, 0.1
    %v646 = vsel %vm644, %v641, %v645
    %s647 = scalar_lea.vmem %s7, 128
    %v648 = vld [vmem:[%s647] sm:$0xff]
    %v649 = vld [vmem:[%s647 + $0x8] sm:$0xff]
    %v650 = vld [vmem:[%s647 + $0x10] sm:$0xff]
    %v651 = vld [vmem:[%s647 + $0x18] sm:$0xff]
    %v652 = vld [vmem:[%s647 + $0x20] sm:$0xff]
    %v653 = vld [vmem:[%s647 + $0x28] sm:$0xff]
    %v654 = vld [vmem:[%s647 + $0x30] sm:$0xff]
    %v655 = vld [vmem:[%s647 + $0x38] sm:$0xff]
    %v656 = vld [vmem:[%s647 + $0x40] sm:$0xff]
    %v657 = vld [vmem:[%s647 + $0x48] sm:$0xff]
    %v658 = vld [vmem:[%s647 + $0x50] sm:$0xff]
    %v659 = vld [vmem:[%s647 + $0x58] sm:$0xff]
    %v660 = vld [vmem:[%s647 + $0x60] sm:$0xff]
    %v661 = vld [vmem:[%s647 + $0x68] sm:$0xff]
    %v662 = vld [vmem:[%s647 + $0x70] sm:$0xff]
    %v663 = vld [vmem:[%s647 + $0x78] sm:$0xff]
    %s664 = scalar_lea.vmem %s8, 1
    %v665 = vld [vmem:[%s664] sm:$0x1]
    %v667 = vlaneseq
    %v668 = vshrl.u32 %v667, 7
    %v669 = vsub.s32 0, %v668
    %v670 = vrot.slane %v665, %v669
    %672 = vmatprep.subr.mxu0 0.0
    %673 = vmatpush1.msra.mxu0 %v663
    %674 = vmatprep.subr.mxu0 0.0
    %675 = vmatpush1.msra.mxu0 %v662
    %676 = vmatprep.subr.mxu0 0.0
    %677 = vmatpush1.msra.mxu0 %v661
    %678 = vmatprep.subr.mxu0 0.0
    %679 = vmatpush1.msra.mxu0 %v660
    %680 = vmatprep.subr.mxu0 0.0
    %681 = vmatpush1.msra.mxu0 %v659
    %682 = vmatprep.subr.mxu0 0.0
    %683 = vmatpush1.msra.mxu0 %v658
    %684 = vmatprep.subr.mxu0 0.0
    %685 = vmatpush1.msra.mxu0 %v657
    %686 = vmatprep.subr.mxu0 0.0
    %687 = vmatpush1.msra.mxu0 %v656
    %688 = vmatprep.subr.mxu0 0.0
    %689 = vmatpush1.msra.mxu0 %v655
    %690 = vmatprep.subr.mxu0 0.0
    %691 = vmatpush1.msra.mxu0 %v654
    %692 = vmatprep.subr.mxu0 0.0
    %693 = vmatpush1.msra.mxu0 %v653
    %694 = vmatprep.subr.mxu0 0.0
    %695 = vmatpush1.msra.mxu0 %v652
    %696 = vmatprep.subr.mxu0 0.0
    %697 = vmatpush1.msra.mxu0 %v651
    %698 = vmatprep.subr.mxu0 0.0
    %699 = vmatpush1.msra.mxu0 %v650
    %700 = vmatprep.subr.mxu0 0.0
    %701 = vmatpush1.msra.mxu0 %v649
    %702 = vmatprep.subr.mxu0 0.0
    %703 = vmatpush1.msra.mxu0 %v648
    %704 = vmatprep.subr.mxu0 0.0
    %705 = vmatpush2.msra.mxu0 0.0
    %706 = vmatprep.subr.mxu0 0.0
    %707 = vmatpush2.msra.mxu0 0.0
    %708 = vmatprep.subr.mxu0 0.0
    %709 = vmatpush2.msra.mxu0 0.0
    %710 = vmatprep.subr.mxu0 0.0
    %711 = vmatpush2.msra.mxu0 0.0
    %712 = vmatprep.subr.mxu0 0.0
    %713 = vmatpush2.msra.mxu0 0.0
    %714 = vmatprep.subr.mxu0 0.0
    %715 = vmatpush2.msra.mxu0 0.0
    %716 = vmatprep.subr.mxu0 0.0
    %717 = vmatpush2.msra.mxu0 0.0
    %718 = vmatprep.subr.mxu0 0.0
    %719 = vmatpush2.msra.mxu0 0.0
    %720 = vmatprep.subr.mxu0 0.0
    %721 = vmatpush2.msra.mxu0 0.0
    %722 = vmatprep.subr.mxu0 0.0
    %723 = vmatpush2.msra.mxu0 0.0
    %724 = vmatprep.subr.mxu0 0.0
    %725 = vmatpush2.msra.mxu0 0.0
    %726 = vmatprep.subr.mxu0 0.0
    %727 = vmatpush2.msra.mxu0 0.0
    %728 = vmatprep.subr.mxu0 0.0
    %729 = vmatpush2.msra.mxu0 0.0
    %730 = vmatprep.subr.mxu0 0.0
    %731 = vmatpush2.msra.mxu0 0.0
    %732 = vmatprep.subr.mxu0 0.0
    %733 = vmatpush2.msra.mxu0 0.0
    %734 = vmatprep.subr.mxu0 0.0
    %735 = vmatpush2.msra.mxu0 0.0
    %736 = vmatprep.mubr.f32.mxu0 0.0
    %737 = vmatmul.mubr.f32.gmra.mxu0 %v646
    %v738 = vpop.f32.mrf.mxu0
    %v739 = vadd.f32 %v670, %v738
    %v740 = vpop.f32.mrf.mxu0
    %741 = vdwg.mxu0
    %s742 = scalar_lea.vmem %s9, 128
    %v743 = vld [vmem:[%s742] sm:$0xff]
    %v744 = vld [vmem:[%s742 + $0x8] sm:$0xff]
    %v745 = vld [vmem:[%s742 + $0x10] sm:$0xff]
    %v746 = vld [vmem:[%s742 + $0x18] sm:$0xff]
    %v747 = vld [vmem:[%s742 + $0x20] sm:$0xff]
    %v748 = vld [vmem:[%s742 + $0x28] sm:$0xff]
    %v749 = vld [vmem:[%s742 + $0x30] sm:$0xff]
    %v750 = vld [vmem:[%s742 + $0x38] sm:$0xff]
    %v751 = vld [vmem:[%s742 + $0x40] sm:$0xff]
    %v752 = vld [vmem:[%s742 + $0x48] sm:$0xff]
    %v753 = vld [vmem:[%s742 + $0x50] sm:$0xff]
    %v754 = vld [vmem:[%s742 + $0x58] sm:$0xff]
    %v755 = vld [vmem:[%s742 + $0x60] sm:$0xff]
    %v756 = vld [vmem:[%s742 + $0x68] sm:$0xff]
    %v757 = vld [vmem:[%s742 + $0x70] sm:$0xff]
    %v758 = vld [vmem:[%s742 + $0x78] sm:$0xff]
    %s759 = scalar_lea.vmem %s10, 1
    %v760 = vld [vmem:[%s759] sm:$0x1]
    %v762 = vlaneseq
    %v763 = vshrl.u32 %v762, 7
    %v764 = vsub.s32 0, %v763
    %v765 = vrot.slane %v760, %v764
    %767 = vmatprep.subr.mxu0 0.0
    %768 = vmatpush1.msra.mxu0 %v758
    %769 = vmatprep.subr.mxu0 0.0
    %770 = vmatpush1.msra.mxu0 %v757
    %771 = vmatprep.subr.mxu0 0.0
    %772 = vmatpush1.msra.mxu0 %v756
    %773 = vmatprep.subr.mxu0 0.0
    %774 = vmatpush1.msra.mxu0 %v755
    %775 = vmatprep.subr.mxu0 0.0
    %776 = vmatpush1.msra.mxu0 %v754
    %777 = vmatprep.subr.mxu0 0.0
    %778 = vmatpush1.msra.mxu0 %v753
    %779 = vmatprep.subr.mxu0 0.0
    %780 = vmatpush1.msra.mxu0 %v752
    %781 = vmatprep.subr.mxu0 0.0
    %782 = vmatpush1.msra.mxu0 %v751
    %783 = vmatprep.subr.mxu0 0.0
    %784 = vmatpush1.msra.mxu0 %v750
    %785 = vmatprep.subr.mxu0 0.0
    %786 = vmatpush1.msra.mxu0 %v749
    %787 = vmatprep.subr.mxu0 0.0
    %788 = vmatpush1.msra.mxu0 %v748
    %789 = vmatprep.subr.mxu0 0.0
    %790 = vmatpush1.msra.mxu0 %v747
    %791 = vmatprep.subr.mxu0 0.0
    %792 = vmatpush1.msra.mxu0 %v746
    %793 = vmatprep.subr.mxu0 0.0
    %794 = vmatpush1.msra.mxu0 %v745
    %795 = vmatprep.subr.mxu0 0.0
    %796 = vmatpush1.msra.mxu0 %v744
    %797 = vmatprep.subr.mxu0 0.0
    %798 = vmatpush1.msra.mxu0 %v743
    %799 = vmatprep.subr.mxu0 0.0
    %800 = vmatpush2.msra.mxu0 0.0
    %801 = vmatprep.subr.mxu0 0.0
    %802 = vmatpush2.msra.mxu0 0.0
    %803 = vmatprep.subr.mxu0 0.0
    %804 = vmatpush2.msra.mxu0 0.0
    %805 = vmatprep.subr.mxu0 0.0
    %806 = vmatpush2.msra.mxu0 0.0
    %807 = vmatprep.subr.mxu0 0.0
    %808 = vmatpush2.msra.mxu0 0.0
    %809 = vmatprep.subr.mxu0 0.0
    %810 = vmatpush2.msra.mxu0 0.0
    %811 = vmatprep.subr.mxu0 0.0
    %812 = vmatpush2.msra.mxu0 0.0
    %813 = vmatprep.subr.mxu0 0.0
    %814 = vmatpush2.msra.mxu0 0.0
    %815 = vmatprep.subr.mxu0 0.0
    %816 = vmatpush2.msra.mxu0 0.0
    %817 = vmatprep.subr.mxu0 0.0
    %818 = vmatpush2.msra.mxu0 0.0
    %819 = vmatprep.subr.mxu0 0.0
    %820 = vmatpush2.msra.mxu0 0.0
    %821 = vmatprep.subr.mxu0 0.0
    %822 = vmatpush2.msra.mxu0 0.0
    %823 = vmatprep.subr.mxu0 0.0
    %824 = vmatpush2.msra.mxu0 0.0
    %825 = vmatprep.subr.mxu0 0.0
    %826 = vmatpush2.msra.mxu0 0.0
    %827 = vmatprep.subr.mxu0 0.0
    %828 = vmatpush2.msra.mxu0 0.0
    %829 = vmatprep.subr.mxu0 0.0
    %830 = vmatpush2.msra.mxu0 0.0
    %831 = vmatprep.mubr.f32.mxu0 0.0
    %832 = vmatmul.mubr.f32.gmra.mxu0 %v646
    %v833 = vpop.f32.mrf.mxu0
    %v834 = vadd.f32 %v765, %v833
    %v835 = vpop.f32.mrf.mxu0
    %836 = vdwg.mxu0
    %v837 = vxor.u32 %v834, 2147483648
    %v838 = vmul.f32 %v837, 1.442695
    %v839 = vpow.pop %v838
    %v840 = vadd.f32 %v839, 1.0
    %v841 = vrcp.pop %v840
    %v842 = vmul.f32 1.0, %v841
    %v843 = vmul.f32 %v459, %v842
    %v844 = vsub.f32 1.0, %v842
    %v845 = vmul.f32 %v844, %v739
    %v846 = vadd.f32 %v843, %v845
    %v847 = vld [vmem:[%s11] sm:$0xff]
    %v848 = vld [vmem:[%s13] sm:$0xff]
    %v849 = vld [vmem:[%s13 + $0x8] sm:$0xff]
    %v850 = vld [vmem:[%s13 + $0x10] sm:$0xff]
    %v851 = vld [vmem:[%s13 + $0x18] sm:$0xff]
    %v852 = vxor.u32 %v848, 2147483648
    %v853 = vxor.u32 %v849, 2147483648
    %v854 = vxor.u32 %v850, 2147483648
    %v855 = vxor.u32 %v851, 2147483648
    %v856 = vmul.f32 %v852, 1.442695
    %v857 = vpow.pop %v856
    %v858 = vmul.f32 %v853, 1.442695
    %v859 = vpow.pop %v858
    %v860 = vmul.f32 %v854, 1.442695
    %v861 = vpow.pop %v860
    %v862 = vmul.f32 %v855, 1.442695
    %v863 = vpow.pop %v862
    %v864 = vadd.f32 %v857, 1.0
    %v865 = vadd.f32 %v859, 1.0
    %v866 = vadd.f32 %v861, 1.0
    %v867 = vadd.f32 %v863, 1.0
    %v868 = vrcp.pop %v864
    %v869 = vmul.f32 1.0, %v868
    %v870 = vrcp.pop %v865
    %v871 = vmul.f32 1.0, %v870
    %v872 = vrcp.pop %v866
    %v873 = vmul.f32 1.0, %v872
    %v874 = vrcp.pop %v867
    %v875 = vmul.f32 1.0, %v874
    %v876 = vld [vmem:[%s14] sm:$0xff]
    %v877 = vld [vmem:[%s14 + $0x8] sm:$0xff]
    %v878 = vld [vmem:[%s14 + $0x10] sm:$0xff]
    %v879 = vld [vmem:[%s14 + $0x18] sm:$0xff]
    %v880 = vmax.f32 %v876, 0.0
    %v881 = vmax.f32 %v877, 0.0
    %v882 = vmax.f32 %v878, 0.0
    %v883 = vmax.f32 %v879, 0.0
    %v884 = vand.u32 2147483647, %v876
    %v885 = vand.u32 2147483647, %v877
    %v886 = vand.u32 2147483647, %v878
    %v887 = vand.u32 2147483647, %v879
    %v888 = vsub.f32 0.0, %v884
    %v889 = vsub.f32 0.0, %v885
    %v890 = vsub.f32 0.0, %v886
    %v891 = vsub.f32 0.0, %v887
    %v892 = vmul.f32 %v888, 1.442695
    %v893 = vpow.pop %v892
    %v894 = vmul.f32 %v889, 1.442695
    %v895 = vpow.pop %v894
    %v896 = vmul.f32 %v890, 1.442695
    %v897 = vpow.pop %v896
    %v898 = vmul.f32 %v891, 1.442695
    %v899 = vpow.pop %v898
    %v900 = vadd.f32 %v893, 1.0
    %v901 = vlog2.pop %v900
    %v902 = vmul.f32 %v901, 0.6931472
    %v903 = vmul.f32 -0.5, %v893
    %v904 = vadd.f32 %v903, 1.0
    %v905 = vmul.f32 %v904, %v893
    %v906 = vand.u32 2147483647, %v893
    %vm907 = vcmp.lt.f32.partialorder %v906, 0.0004427343
    %v908 = vsel %vm907, %v905, %v902
    %v909 = vadd.f32 %v895, 1.0
    %v910 = vlog2.pop %v909
    %v911 = vmul.f32 %v910, 0.6931472
    %v912 = vmul.f32 -0.5, %v895
    %v913 = vadd.f32 %v912, 1.0
    %v914 = vmul.f32 %v913, %v895
    %v915 = vand.u32 2147483647, %v895
    %vm916 = vcmp.lt.f32.partialorder %v915, 0.0004427343
    %v917 = vsel %vm916, %v914, %v911
    %v918 = vadd.f32 %v897, 1.0
    %v919 = vlog2.pop %v918
    %v920 = vmul.f32 %v919, 0.6931472
    %v921 = vmul.f32 -0.5, %v897
    %v922 = vadd.f32 %v921, 1.0
    %v923 = vmul.f32 %v922, %v897
    %v924 = vand.u32 2147483647, %v897
    %vm925 = vcmp.lt.f32.partialorder %v924, 0.0004427343
    %v926 = vsel %vm925, %v923, %v920
    %v927 = vadd.f32 %v899, 1.0
    %v928 = vlog2.pop %v927
    %v929 = vmul.f32 %v928, 0.6931472
    %v930 = vmul.f32 -0.5, %v899
    %v931 = vadd.f32 %v930, 1.0
    %v932 = vmul.f32 %v931, %v899
    %v933 = vand.u32 2147483647, %v899
    %vm934 = vcmp.lt.f32.partialorder %v933, 0.0004427343
    %v935 = vsel %vm934, %v932, %v929
    %v936 = vadd.f32 %v880, %v908
    %v937 = vadd.f32 %v881, %v917
    %v938 = vadd.f32 %v882, %v926
    %v939 = vadd.f32 %v883, %v935
    %v940 = vld [vmem:[%s12] sm:$0xff]
    %v941 = vld [vmem:[%s12 + $0x8] sm:$0xff]
    %v942 = vld [vmem:[%s12 + $0x10] sm:$0xff]
    %v943 = vld [vmem:[%s12 + $0x18] sm:$0xff]
    %v944 = vlaneseq
    %v945 = vshrl.u32 %v944, 7
    %v946 = vsub.s32 7, %v945
    %v947 = vrot.slane %v846, %v946
    %v948 = vmul.f32 %v847, %v947
    %v949 = vmul.f32 %v940, %v869
    %v950 = vmul.f32 %v941, %v871
    %v951 = vmul.f32 %v942, %v873
    %v952 = vmul.f32 %v943, %v875
    %v953 = vld [vmem:[%s15] sm:$0x1]
    %v955 = vlaneseq
    %v956 = vshrl.u32 %v955, 7
    %v957 = vsub.s32 0, %v956
    %v958 = vrot.slane %v953, %v957
    %v961 = vsel %vm91, %v948, 0
    %963 = vmatprep.subr.mxu0 0.0
    %964 = vmatpush1.msra.mxu0 0.0
    %965 = vmatprep.subr.mxu0 0.0
    %966 = vmatpush1.msra.mxu0 0.0
    %967 = vmatprep.subr.mxu0 0.0
    %968 = vmatpush1.msra.mxu0 0.0
    %969 = vmatprep.subr.mxu0 0.0
    %970 = vmatpush1.msra.mxu0 0.0
    %971 = vmatprep.subr.mxu0 0.0
    %972 = vmatpush1.msra.mxu0 0.0
    %973 = vmatprep.subr.mxu0 0.0
    %974 = vmatpush1.msra.mxu0 0.0
    %975 = vmatprep.subr.mxu0 0.0
    %976 = vmatpush1.msra.mxu0 0.0
    %977 = vmatprep.subr.mxu0 0.0
    %978 = vmatpush1.msra.mxu0 0.0
    %979 = vmatprep.subr.mxu0 0.0
    %980 = vmatpush1.msra.mxu0 0.0
    %981 = vmatprep.subr.mxu0 0.0
    %982 = vmatpush1.msra.mxu0 0.0
    %983 = vmatprep.subr.mxu0 0.0
    %984 = vmatpush1.msra.mxu0 0.0
    %985 = vmatprep.subr.mxu0 0.0
    %986 = vmatpush1.msra.mxu0 0.0
    %987 = vmatprep.subr.mxu0 0.0
    %988 = vmatpush1.msra.mxu0 %v952
    %989 = vmatprep.subr.mxu0 0.0
    %990 = vmatpush1.msra.mxu0 %v951
    %991 = vmatprep.subr.mxu0 0.0
    %992 = vmatpush1.msra.mxu0 %v950
    %993 = vmatprep.subr.mxu0 0.0
    %994 = vmatpush1.msra.mxu0 %v949
    %995 = vmatprep.subr.mxu0 0.0
    %996 = vmatpush2.msra.mxu0 0.0
    %997 = vmatprep.subr.mxu0 0.0
    %998 = vmatpush2.msra.mxu0 0.0
    %999 = vmatprep.subr.mxu0 0.0
    %1000 = vmatpush2.msra.mxu0 0.0
    %1001 = vmatprep.subr.mxu0 0.0
    %1002 = vmatpush2.msra.mxu0 0.0
    %1003 = vmatprep.subr.mxu0 0.0
    %1004 = vmatpush2.msra.mxu0 0.0
    %1005 = vmatprep.subr.mxu0 0.0
    %1006 = vmatpush2.msra.mxu0 0.0
    %1007 = vmatprep.subr.mxu0 0.0
    %1008 = vmatpush2.msra.mxu0 0.0
    %1009 = vmatprep.subr.mxu0 0.0
    %1010 = vmatpush2.msra.mxu0 0.0
    %1011 = vmatprep.subr.mxu0 0.0
    %1012 = vmatpush2.msra.mxu0 0.0
    %1013 = vmatprep.subr.mxu0 0.0
    %1014 = vmatpush2.msra.mxu0 0.0
    %1015 = vmatprep.subr.mxu0 0.0
    %1016 = vmatpush2.msra.mxu0 0.0
    %1017 = vmatprep.subr.mxu0 0.0
    %1018 = vmatpush2.msra.mxu0 0.0
    %1019 = vmatprep.subr.mxu0 0.0
    %1020 = vmatpush2.msra.mxu0 0.0
    %1021 = vmatprep.subr.mxu0 0.0
    %1022 = vmatpush2.msra.mxu0 0.0
    %1023 = vmatprep.subr.mxu0 0.0
    %1024 = vmatpush2.msra.mxu0 0.0
    %1025 = vmatprep.subr.mxu0 0.0
    %1026 = vmatpush2.msra.mxu0 0.0
    %1027 = vmatprep.mubr.f32.mxu0 0.0
    %1028 = vmatmul.mubr.f32.gmra.mxu0 %v961
    %v1029 = vpop.f32.mrf.mxu0
    %v1030 = vadd.f32 %v958, %v1029
    %v1031 = vpop.f32.mrf.mxu0
    %1032 = vdwg.mxu0
    %v1033 = vld [vmem:[%s16] sm:$0x1]
    %v1034 = vmax.f32 %v1033, 0.0
    %v1035 = vand.u32 2147483647, %v1033
    %v1036 = vsub.f32 0.0, %v1035
    %v1037 = vmul.f32 %v1036, 1.442695
    %v1038 = vpow.pop %v1037
    %v1039 = vadd.f32 %v1038, 1.0
    %v1040 = vlog2.pop %v1039
    %v1041 = vmul.f32 %v1040, 0.6931472
    %v1042 = vmul.f32 -0.5, %v1038
    %v1043 = vadd.f32 %v1042, 1.0
    %v1044 = vmul.f32 %v1043, %v1038
    %v1045 = vand.u32 2147483647, %v1038
    %vm1046 = vcmp.lt.f32.partialorder %v1045, 0.0004427343
    %v1047 = vsel %vm1046, %v1044, %v1041
    %v1048 = vadd.f32 %v1034, %v1047
    %v1049 = vmul.f32 %v847, %v847
    %v1050 = vmul.f32 %v936, %v936
    %v1051 = vmul.f32 %v937, %v937
    %v1052 = vmul.f32 %v938, %v938
    %v1053 = vmul.f32 %v939, %v939
    %v1054 = vmul.f32 %v869, %v1050
    %v1055 = vmul.f32 %v871, %v1051
    %v1056 = vmul.f32 %v873, %v1052
    %v1057 = vmul.f32 %v875, %v1053
    %v1058 = vmul.f32 %v948, %v948
    %v1059 = vsub.f32 1.0, %v869
    %v1060 = vsub.f32 1.0, %v871
    %v1061 = vsub.f32 1.0, %v873
    %v1062 = vsub.f32 1.0, %v875
    %v1063 = vmul.f32 %v869, %v1059
    %v1064 = vmul.f32 %v871, %v1060
    %v1065 = vmul.f32 %v873, %v1061
    %v1066 = vmul.f32 %v875, %v1062
    %v1067 = vmul.f32 %v940, %v940
    %v1068 = vmul.f32 %v941, %v941
    %v1069 = vmul.f32 %v942, %v942
    %v1070 = vmul.f32 %v943, %v943
    %v1071 = vmul.f32 %v1063, %v1067
    %v1072 = vmul.f32 %v1064, %v1068
    %v1073 = vmul.f32 %v1065, %v1069
    %v1074 = vmul.f32 %v1066, %v1070
    %v1076 = vsel %vm91, %v1058, 0
    %1078 = vmatprep.subr.mxu0 0.0
    %1079 = vmatpush1.msra.mxu0 0.0
    %1080 = vmatprep.subr.mxu0 0.0
    %1081 = vmatpush1.msra.mxu0 0.0
    %1082 = vmatprep.subr.mxu0 0.0
    %1083 = vmatpush1.msra.mxu0 0.0
    %1084 = vmatprep.subr.mxu0 0.0
    %1085 = vmatpush1.msra.mxu0 0.0
    %1086 = vmatprep.subr.mxu0 0.0
    %1087 = vmatpush1.msra.mxu0 0.0
    %1088 = vmatprep.subr.mxu0 0.0
    %1089 = vmatpush1.msra.mxu0 0.0
    %1090 = vmatprep.subr.mxu0 0.0
    %1091 = vmatpush1.msra.mxu0 0.0
    %1092 = vmatprep.subr.mxu0 0.0
    %1093 = vmatpush1.msra.mxu0 0.0
    %1094 = vmatprep.subr.mxu0 0.0
    %1095 = vmatpush1.msra.mxu0 0.0
    %1096 = vmatprep.subr.mxu0 0.0
    %1097 = vmatpush1.msra.mxu0 0.0
    %1098 = vmatprep.subr.mxu0 0.0
    %1099 = vmatpush1.msra.mxu0 0.0
    %1100 = vmatprep.subr.mxu0 0.0
    %1101 = vmatpush1.msra.mxu0 0.0
    %1102 = vmatprep.subr.mxu0 0.0
    %1103 = vmatpush1.msra.mxu0 %v1074
    %1104 = vmatprep.subr.mxu0 0.0
    %1105 = vmatpush1.msra.mxu0 %v1073
    %1106 = vmatprep.subr.mxu0 0.0
    %1107 = vmatpush1.msra.mxu0 %v1072
    %1108 = vmatprep.subr.mxu0 0.0
    %1109 = vmatpush1.msra.mxu0 %v1071
    %1110 = vmatprep.subr.mxu0 0.0
    %1111 = vmatpush2.msra.mxu0 0.0
    %1112 = vmatprep.subr.mxu0 0.0
    %1113 = vmatpush2.msra.mxu0 0.0
    %1114 = vmatprep.subr.mxu0 0.0
    %1115 = vmatpush2.msra.mxu0 0.0
    %1116 = vmatprep.subr.mxu0 0.0
    %1117 = vmatpush2.msra.mxu0 0.0
    %1118 = vmatprep.subr.mxu0 0.0
    %1119 = vmatpush2.msra.mxu0 0.0
    %1120 = vmatprep.subr.mxu0 0.0
    %1121 = vmatpush2.msra.mxu0 0.0
    %1122 = vmatprep.subr.mxu0 0.0
    %1123 = vmatpush2.msra.mxu0 0.0
    %1124 = vmatprep.subr.mxu0 0.0
    %1125 = vmatpush2.msra.mxu0 0.0
    %1126 = vmatprep.subr.mxu0 0.0
    %1127 = vmatpush2.msra.mxu0 0.0
    %1128 = vmatprep.subr.mxu0 0.0
    %1129 = vmatpush2.msra.mxu0 0.0
    %1130 = vmatprep.subr.mxu0 0.0
    %1131 = vmatpush2.msra.mxu0 0.0
    %1132 = vmatprep.subr.mxu0 0.0
    %1133 = vmatpush2.msra.mxu0 0.0
    %1134 = vmatprep.subr.mxu0 0.0
    %1135 = vmatpush2.msra.mxu0 0.0
    %1136 = vmatprep.subr.mxu0 0.0
    %1137 = vmatpush2.msra.mxu0 0.0
    %1138 = vmatprep.subr.mxu0 0.0
    %1139 = vmatpush2.msra.mxu0 0.0
    %1140 = vmatprep.subr.mxu0 0.0
    %1141 = vmatpush2.msra.mxu0 0.0
    %1142 = vmatprep.mubr.f32.mxu0 0.0
    %1143 = vmatmul.mubr.f32.gmra.mxu0 %v1076
    %v1144 = vpop.f32.mrf.mxu0
    %v1145 = vadd.f32 0.0, %v1144
    %v1146 = vpop.f32.mrf.mxu0
    %1147 = vdwg.mxu0
    %v1149 = vsel %vm91, %v1049, 0
    %1151 = vmatprep.subr.mxu0 0.0
    %1152 = vmatpush1.msra.mxu0 0.0
    %1153 = vmatprep.subr.mxu0 0.0
    %1154 = vmatpush1.msra.mxu0 0.0
    %1155 = vmatprep.subr.mxu0 0.0
    %1156 = vmatpush1.msra.mxu0 0.0
    %1157 = vmatprep.subr.mxu0 0.0
    %1158 = vmatpush1.msra.mxu0 0.0
    %1159 = vmatprep.subr.mxu0 0.0
    %1160 = vmatpush1.msra.mxu0 0.0
    %1161 = vmatprep.subr.mxu0 0.0
    %1162 = vmatpush1.msra.mxu0 0.0
    %1163 = vmatprep.subr.mxu0 0.0
    %1164 = vmatpush1.msra.mxu0 0.0
    %1165 = vmatprep.subr.mxu0 0.0
    %1166 = vmatpush1.msra.mxu0 0.0
    %1167 = vmatprep.subr.mxu0 0.0
    %1168 = vmatpush1.msra.mxu0 0.0
    %1169 = vmatprep.subr.mxu0 0.0
    %1170 = vmatpush1.msra.mxu0 0.0
    %1171 = vmatprep.subr.mxu0 0.0
    %1172 = vmatpush1.msra.mxu0 0.0
    %1173 = vmatprep.subr.mxu0 0.0
    %1174 = vmatpush1.msra.mxu0 0.0
    %1175 = vmatprep.subr.mxu0 0.0
    %1176 = vmatpush1.msra.mxu0 %v1057
    %1177 = vmatprep.subr.mxu0 0.0
    %1178 = vmatpush1.msra.mxu0 %v1056
    %1179 = vmatprep.subr.mxu0 0.0
    %1180 = vmatpush1.msra.mxu0 %v1055
    %1181 = vmatprep.subr.mxu0 0.0
    %1182 = vmatpush1.msra.mxu0 %v1054
    %1183 = vmatprep.subr.mxu0 0.0
    %1184 = vmatpush2.msra.mxu0 0.0
    %1185 = vmatprep.subr.mxu0 0.0
    %1186 = vmatpush2.msra.mxu0 0.0
    %1187 = vmatprep.subr.mxu0 0.0
    %1188 = vmatpush2.msra.mxu0 0.0
    %1189 = vmatprep.subr.mxu0 0.0
    %1190 = vmatpush2.msra.mxu0 0.0
    %1191 = vmatprep.subr.mxu0 0.0
    %1192 = vmatpush2.msra.mxu0 0.0
    %1193 = vmatprep.subr.mxu0 0.0
    %1194 = vmatpush2.msra.mxu0 0.0
    %1195 = vmatprep.subr.mxu0 0.0
    %1196 = vmatpush2.msra.mxu0 0.0
    %1197 = vmatprep.subr.mxu0 0.0
    %1198 = vmatpush2.msra.mxu0 0.0
    %1199 = vmatprep.subr.mxu0 0.0
    %1200 = vmatpush2.msra.mxu0 0.0
    %1201 = vmatprep.subr.mxu0 0.0
    %1202 = vmatpush2.msra.mxu0 0.0
    %1203 = vmatprep.subr.mxu0 0.0
    %1204 = vmatpush2.msra.mxu0 0.0
    %1205 = vmatprep.subr.mxu0 0.0
    %1206 = vmatpush2.msra.mxu0 0.0
    %1207 = vmatprep.subr.mxu0 0.0
    %1208 = vmatpush2.msra.mxu0 0.0
    %1209 = vmatprep.subr.mxu0 0.0
    %1210 = vmatpush2.msra.mxu0 0.0
    %1211 = vmatprep.subr.mxu0 0.0
    %1212 = vmatpush2.msra.mxu0 0.0
    %1213 = vmatprep.subr.mxu0 0.0
    %1214 = vmatpush2.msra.mxu0 0.0
    %1215 = vmatprep.mubr.f32.mxu0 0.0
    %1216 = vmatmul.mubr.f32.gmra.mxu0 %v1149
    %v1217 = vpop.f32.mrf.mxu0
    %v1218 = vadd.f32 %v1145, %v1217
    %v1219 = vpop.f32.mrf.mxu0
    %1220 = vdwg.mxu0
    %v1221 = vmul.f32 %v1048, %v1048
    %v1223 = vlaneseq
    %v1224 = vshrl.u32 %v1223, 7
    %v1225 = vsub.s32 0, %v1224
    %v1226 = vrot.slane %v1221, %v1225
    %v1228 = vadd.f32 %v1218, %v1226
    %v1229 = vrsqrt.pop %v1228
    %v1230 = vmul.f32 %v1228, %v1229
    %vm1231 = vcmp.eq.f32.partialorder %v1228, inf
    %v1232 = vsel %vm1231, %v1228, %v1230
    %vm1233 = vcmp.eq.f32.partialorder %v1228, 0.0
    %v1234 = vand.u32 %v1228, 2147483648
    %v1235 = vsel %vm1233, %v1234, %v1232
    %v1236 = vld [vmem:[%s17] sm:$0xff]
    %v1237 = vmul.f32 %v1235, %v1236
    %v1238 = vadd.f32 %v1030, %v1237
    %vm1239 = vcmask 130048
    %1240 = vst.msk [vmem:[#allocation2] sm:$0xff] %vm1239, %v1238
    // Predicated region
    $region74: #{fused_forward.1} parent=1 // pred_check
      _
    $region75: #{fused_forward.1} parent=1 // pred_check_branch
      %1242 = sbr.rel (0) target = $region77
    $region76: #{fused_forward.1} parent=1 // pred_region
      %s1244 = ssub.s32 128, 128
      %1245 = vsyncadd [#allocation3], %s1244
      %s1247 = sshll.u32 [#allocation2], 4
      %s1248 = int_to_ptr.vmem [resolvable:$true] %s1247
      %1250 = dma.vmem_to_hbm [thread:$0]  %s1248, 128, %s18, [#allocation3]
    $region77: #{fused_forward.1} parent=1 // pred_fallthru
      _
    // Predicated region
    $region78: #{fused_forward.1} parent=1 // pred_check
      _
    $region79: #{fused_forward.1} parent=1 // pred_check_branch
      %1252 = sbr.rel (0) target = $region81
    $region80: #{fused_forward.1} parent=1 // pred_region
      %1253 = dma.done [#allocation3], 128
    $region81: #{fused_forward.1} parent=1 // pred_fallthru
      _
    %1254 = vsyncpa [#allocation3], 1

</llo_original>
